<compile_context>
chip_gen: v6e
topology: v6e:2x2x1
jax: 0.10.0
libtpu: 0.0.40
codegen_flags: <defaults>
</compile_context>

<pallas_src>
import functools

import jax
import jax.numpy as jnp
from jax import lax
from jax.experimental import pallas as pl
from jax.experimental.pallas import tpu as pltpu


def _round_up(a, m):
    return (a + m - 1) // m * m


def _cross_attn_kernel(x_ref, ctx_ref, wqk_ref, wout_ref, bp_ref, o_ref,
                       *, num_heads, ctx_dim, pack, compute_dtype):
    """One grid step = a block of TN flattened rows attending to their own P context tokens.

    ctx_ref is the lane-dense packed view (TN, G, J*Cc) with G = P // J; token p = J*g + j
    lives in lane block j of group g.
    """
    f32 = jnp.float32
    cdt = compute_dtype
    tn = x_ref.shape[0]
    H, Cc, J = num_heads, ctx_dim, pack

    ctx = ctx_ref[...].astype(cdt)                               # (TN, G, J*Cc)

    # Folded, pre-scaled query:  qk[n, h*Cc + cc] = scale * x[n] @ Wq_h^T @ Wk_h[:, cc]
    qk = jnp.dot(x_ref[...].astype(cdt), wqk_ref[...],
                 preferred_element_type=f32)                     # (TN, H*Cc)
    qk3 = qk.reshape(tn, H, Cc).astype(cdt)                      # (TN, H, Cc)

    # Block-diagonal replication across the J packed token slots:
    #   rhs_T[n, j*H + h, j*Cc + cc] = qk3[n, h, cc]
    if J > 1:
        z = jnp.zeros_like(qk3)
        rows = [jnp.concatenate([qk3 if jj == j else z for jj in range(J)], axis=2)
                for j in range(J)]
        rhs_T = jnp.concatenate(rows, axis=1)                    # (TN, J*H, J*Cc)
    else:
        rhs_T = qk3

    # Scores at full MXU lane width:
    #   s[n, j*H + h, g] = <scaled q_h(n) @ Wk_h , context[n, J*g + j, :]>
    s = lax.dot_general(rhs_T, ctx, (((2,), (2,)), ((0,), (0,))),
                        preferred_element_type=f32)              # (TN, J*H, G)

    # Numerically-stable softmax over all P = J*G context tokens of each head.
    # Per-(j, h) stats over g, then combined across the J sublane blocks.
    m1 = jnp.max(s, axis=2, keepdims=True)                       # (TN, J*H, 1)
    m_h = m1[:, 0:H, :]
    for j in range(1, J):
        m_h = jnp.maximum(m_h, m1[:, j * H:(j + 1) * H, :])      # (TN, H, 1)
    m = jnp.concatenate([m_h] * J, axis=1) if J > 1 else m_h     # (TN, J*H, 1)

    e = jnp.exp(s - m)                                           # (TN, J*H, G)
    l1 = jnp.sum(e, axis=2, keepdims=True)                       # (TN, J*H, 1)
    l_h = l1[:, 0:H, :]
    for j in range(1, J):
        l_h = l_h + l1[:, j * H:(j + 1) * H, :]
    l = jnp.concatenate([l_h] * J, axis=1) if J > 1 else l_h     # (TN, J*H, 1)

    w = (e * pl.reciprocal(l, approx=True)).astype(cdt)          # (TN, J*H, G)

    # Weighted sum of the raw packed context, then fold the j-diagonal blocks:
    #   ob[n, h, cc] = sum_j ob2[n, j*H + h, j*Cc + cc]
    ob2 = lax.dot_general(w, ctx, (((2,), (1,)), ((0,), (0,))),
                          preferred_element_type=f32)            # (TN, J*H, J*Cc)
    ob = ob2[:, 0:H, 0:Cc]
    for j in range(1, J):
        ob = ob + ob2[:, j * H:(j + 1) * H, j * Cc:(j + 1) * Cc]  # (TN, H, Cc)

    # Fused Wv + output projection (bias=True).
    y = jnp.dot(ob.reshape(tn, H * Cc).astype(cdt), wout_ref[...],
                preferred_element_type=f32) + bp_ref[...]
    o_ref[...] = y.astype(o_ref.dtype)


def cross_attention_spatial(x, context, params, *, num_heads=8, qk_scale=None,
                            block_rows=64, compute_dtype=jnp.bfloat16,
                            vmem_limit_bytes=None):
    """Pallas implementation of CrossAttention.forward(x, context, spatial=True).

    block_rows: flattened (b, t) query rows per grid step (64 fits v7x's 64 MiB VMEM with
    the lane-dense context packing; can be raised to 128 on v5e/v6e).  compute_dtype is
    used for the context stream and all MXU operands; softmax / accumulation stay f32.
    Pass context already in bfloat16 to also halve the HBM->VMEM DMA.
    """
    B, T, C = x.shape
    N = B * T
    Nc, P, Cc = context.shape
    assert Nc == N, "context must be (B*T, P, context_dim)"
    H = num_heads
    assert C % H == 0
    hd = C // H
    scale = float(qk_scale) if qk_scale is not None else hd ** (-0.5)
    cdt = jnp.dtype(compute_dtype)

    wq = jnp.asarray(params["wq"], jnp.float32)       # (C, C)
    wkv = jnp.asarray(params["wkv"], jnp.float32)     # (2C, Cc)
    wp = jnp.asarray(params["wp"], jnp.float32)       # (C, C)
    bp = jnp.asarray(params["bp"], jnp.float32)       # (C,)

    # Fold Wq/Wk into per-head (C, Cc) blocks (scale included) and Wv/Wproj into one
    # (H*Cc, C) matrix, so the kernel never needs head masks / per-head loops.
    wq_h = wq.reshape(H, hd, C)
    wk_h = wkv[:C].reshape(H, hd, Cc)
    wv_h = wkv[C:].reshape(H, hd, Cc)
    wp_h = wp.T.reshape(H, hd, C)
    wqk = (scale * jnp.einsum("hdc,hde->che", wq_h, wk_h)).reshape(C, H * Cc)
    wout = jnp.einsum("hdc,hdk->hck", wv_h, wp_h).reshape(H * Cc, C)
    bp2 = bp.reshape(1, C)

    # Lane-dense packing of the context: (N, P, Cc) -> (N, P//J, J*Cc).  Free in HBM
    # (contiguous reshape); makes the dominant DMA / MXU stream 128 lanes wide.
    pack = 1
    for cand in (4, 2):
        if P % cand == 0 and cand * Cc <= 128:
            pack = cand
            break
    G = P // pack
    Lc = pack * Cc
    ctx = context.reshape(N, G, Lc)
    x2 = x.reshape(N, C)

    # Row tile: biggest multiple of 8 <= block_rows (or all rows when N is small).
    # No wrapper-side jnp.pad: partial final blocks are handled by Pallas, and all
    # per-row math is independent so garbage tail rows are simply dropped on store.
    if N <= block_rows:
        tn = N
    else:
        tn = max(8, (block_rows // 8) * 8)
    grid = (pl.cdiv(N, tn),)

    if vmem_limit_bytes is None:
        g_sub = _round_up(G, 8)
        l_pad = _round_up(Lc, 128)
        g_lane = _round_up(G, 128)
        ctx_block = tn * g_sub * l_pad * jnp.dtype(context.dtype).itemsize
        inter = tn * (g_sub * l_pad * cdt.itemsize            # ctx compute-dtype copy
                      + 3 * pack * H * g_lane * 4             # s / e / w
                      + 2 * pack * H * l_pad * 4)             # rhs_T / ob2
        vmem_limit_bytes = 2 * ctx_block + inter + (8 << 20)  # 2x = double buffering
        vmem_limit_bytes = int(max(32 << 20, min(vmem_limit_bytes, 100 << 20)))

    kernel = functools.partial(_cross_attn_kernel, num_heads=H, ctx_dim=Cc,
                               pack=pack, compute_dtype=cdt)

    out = pl.pallas_call(
        kernel,
        out_shape=jax.ShapeDtypeStruct((N, C), x.dtype),
        grid_spec=pltpu.PrefetchScalarGridSpec(
            num_scalar_prefetch=0,
            grid=grid,
            in_specs=[
                pl.BlockSpec((tn, C), lambda n: (n, 0)),           # x rows
                pl.BlockSpec((tn, G, Lc), lambda n: (n, 0, 0)),    # packed context rows
                pl.BlockSpec((C, H * Cc), lambda n: (0, 0)),       # W_qk (scale folded)
                pl.BlockSpec((H * Cc, C), lambda n: (0, 0)),       # W_out (Wv + proj fused)
                pl.BlockSpec((1, C), lambda n: (0, 0)),            # proj bias
            ],
            out_specs=pl.BlockSpec((tn, C), lambda n: (n, 0)),
        ),
        compiler_params=pltpu.CompilerParams(
            dimension_semantics=("parallel",),
            vmem_limit_bytes=vmem_limit_bytes),
    )(x2, ctx, wqk.astype(cdt), wout.astype(cdt), bp2)

    return out.reshape(B, T, C)


def _ref_forward(x, context, params, *, num_heads, qk_scale=None):
    """Pure-JAX reference of the spatial=True path (for correctness checking)."""
    B, T, C = x.shape
    N = B * T
    hd = C // num_heads
    scale = qk_scale if qk_scale is not None else hd ** (-0.5)
    wq, wkv, wp, bp = params["wq"], params["wkv"], params["wp"], params["bp"]

    x2 = x.reshape(N, C)
    q = (x2 @ wq.T).reshape(N, num_heads, hd)                 # (N, H, hd)
    kv = context @ wkv.T                                      # (N, P, 2C)
    k = kv[:, :, :C].reshape(N, -1, num_heads, hd)
    v = kv[:, :, C:].reshape(N, -1, num_heads, hd)
    s = jnp.einsum("nhd,nphd->nhp", q, k) * scale
    w = jax.nn.softmax(s, axis=-1)
    o = jnp.einsum("nhp,nphd->nhd", w, v).reshape(N, C)
    y = o @ wp.T + bp
    return y.reshape(B, T, C)


def _init_params(key, dim, context_dim, dtype=jnp.float32):
    """Deterministic torch.nn.Linear-style init (uniform +/- 1/sqrt(fan_in))."""
    k1, k2, k3, k4 = jax.random.split(key, 4)
    bq = 1.0 / (dim ** 0.5)
    bkv = 1.0 / (context_dim ** 0.5)
    return {
        "wq": jax.random.uniform(k1, (dim, dim), dtype, -bq, bq),
        "wkv": jax.random.uniform(k2, (2 * dim, context_dim), dtype, -bkv, bkv),
        "wp": jax.random.uniform(k3, (dim, dim), dtype, -bq, bq),
        "bp": jax.random.uniform(k4, (dim,), dtype, -bq, bq),
    }


if __name__ == "__main__":
    # Small shapes consistent with the module: dim=32, num_heads=8 (head_dim=4), P=700
    # (hardcoded in the PyTorch forward), batch=2, tokens=4.
    B, T, C = 2, 4, 32
    num_heads = 8
    P = 700
    context_dim = C  # context_dim=None -> dim

    key = jax.random.PRNGKey(0)
    kx, kc, kp = jax.random.split(key, 3)
    x = jax.random.normal(kx, (B, T, C), jnp.float32)
    context = jax.random.normal(kc, (B * T, P, context_dim), jnp.float32)
    params = _init_params(kp, C, context_dim)

    ref = _ref_forward(x, context, params, num_heads=num_heads)

    # Full f32 path (tight tolerance check).
    out_f32 = cross_attention_spatial(x, context, params, num_heads=num_heads,
                                      compute_dtype=jnp.float32)
    out_f32 = jax.block_until_ready(out_f32)
    assert out_f32.shape == (B, T, C)
    assert jnp.allclose(out_f32, ref, rtol=5e-3, atol=5e-3), "f32 kernel mismatch vs. reference"

    # Default path: bf16 context stream / MXU operands, f32 accumulation + softmax.
    out_bf16 = cross_attention_spatial(x, context, params, num_heads=num_heads)
    out_bf16 = jax.block_until_ready(out_bf16)
    assert jnp.allclose(out_bf16, ref, rtol=1e-1, atol=1e-1), "bf16 kernel mismatch vs. reference"

    print("KERNEL_OK")
</pallas_src>

<mosaic_0001>
module attributes {stable_mosaic.version = 11 : i64} {
  func.func @_cross_attn_kernel(%arg0: i32, %arg1: memref<8x32xf32, #tpu.memory_space<vmem>>, %arg2: memref<8x175x128xf32, #tpu.memory_space<vmem>>, %arg3: memref<32x256xf32, #tpu.memory_space<vmem>>, %arg4: memref<256x32xf32, #tpu.memory_space<vmem>>, %arg5: memref<1x32xf32, #tpu.memory_space<vmem>>, %arg6: memref<8x32xf32, #tpu.memory_space<vmem>>) attributes {dimension_semantics = [#tpu.dimension_semantics<parallel>], iteration_bounds = array<i64: 1>, scalar_prefetch = 0 : i64, scratch_operands = 0 : i64, tpu.core_type = #tpu.core_type<tc>, window_params = [{transform_indices = @transform_0, window_bounds = array<i64: 8, 32>}, {transform_indices = @transform_1, window_bounds = array<i64: 8, 175, 128>}, {pipeline_mode = #tpu.pipeline_mode<synchronous>, transform_indices = @transform_2, window_bounds = array<i64: 32, 256>}, {pipeline_mode = #tpu.pipeline_mode<synchronous>, transform_indices = @transform_3, window_bounds = array<i64: 256, 32>}, {pipeline_mode = #tpu.pipeline_mode<synchronous>, transform_indices = @transform_4, window_bounds = array<i64: 1, 32>}, {transform_indices = @transform_5, window_bounds = array<i64: 8, 32>}]} {
    %c0 = arith.constant 0 : index
    %c0_0 = arith.constant 0 : index
    %c0_1 = arith.constant 0 : index
    %0 = vector.load %arg2[%c0, %c0_0, %c0_1] : memref<8x175x128xf32, #tpu.memory_space<vmem>>, vector<8x175x128xf32>
    %c0_2 = arith.constant 0 : index
    %c0_3 = arith.constant 0 : index
    %1 = vector.load %arg1[%c0_2, %c0_3] : memref<8x32xf32, #tpu.memory_space<vmem>>, vector<8x32xf32>
    %c0_4 = arith.constant 0 : index
    %c0_5 = arith.constant 0 : index
    %2 = vector.load %arg3[%c0_4, %c0_5] : memref<32x256xf32, #tpu.memory_space<vmem>>, vector<32x256xf32>
    %cst = arith.constant dense<0.000000e+00> : vector<8x256xf32>
    %3 = tpu.matmul %1, %2, %cst {dimension_numbers = #tpu.dot_dimension_numbers<[1], [0], [0], [1], [0, 0, 1, 1], [], []>} : vector<8x32xf32>, vector<32x256xf32>, vector<8x256xf32> -> vector<8x256xf32>
    %4 = vector.shape_cast %3 : vector<8x256xf32> to vector<8x8x32xf32>
    %cst_6 = arith.constant 0.000000e+00 : f32
    %5 = vector.broadcast %cst_6 : f32 to vector<8x8x32xf32>
    %6 = tpu.concatenate %4, %5, %5, %5 in 2 : vector<8x8x32xf32>, vector<8x8x32xf32>, vector<8x8x32xf32>, vector<8x8x32xf32> -> vector<8x8x128xf32>
    %7 = tpu.concatenate %5, %4, %5, %5 in 2 : vector<8x8x32xf32>, vector<8x8x32xf32>, vector<8x8x32xf32>, vector<8x8x32xf32> -> vector<8x8x128xf32>
    %8 = tpu.concatenate %5, %5, %4, %5 in 2 : vector<8x8x32xf32>, vector<8x8x32xf32>, vector<8x8x32xf32>, vector<8x8x32xf32> -> vector<8x8x128xf32>
    %9 = tpu.concatenate %5, %5, %5, %4 in 2 : vector<8x8x32xf32>, vector<8x8x32xf32>, vector<8x8x32xf32>, vector<8x8x32xf32> -> vector<8x8x128xf32>
    %10 = tpu.concatenate %6, %7, %8, %9 in 1 : vector<8x8x128xf32>, vector<8x8x128xf32>, vector<8x8x128xf32>, vector<8x8x128xf32> -> vector<8x32x128xf32>
    %cst_7 = arith.constant dense<0.000000e+00> : vector<8x32x175xf32>
    %11 = tpu.matmul %10, %0, %cst_7 {dimension_numbers = #tpu.dot_dimension_numbers<[2], [2], [1], [1], [0, 0, 0, 1, 1, 1], [0], [0]>} : vector<8x32x128xf32>, vector<8x175x128xf32>, vector<8x32x175xf32> -> vector<8x32x175xf32>
    %cst_8 = arith.constant dense<0xFF800000> : vector<8x32xf32>
    %12 = vector.multi_reduction <maximumf>, %11, %cst_8 [2] : vector<8x32x175xf32> to vector<8x32xf32>
    %13 = vector.shape_cast %12 : vector<8x32xf32> to vector<8x32x1xf32>
    %14 = vector.extract_strided_slice %13 {offsets = [0, 0, 0], sizes = [8, 8, 1], strides = [1, 1, 1]} : vector<8x32x1xf32> to vector<8x8x1xf32>
    %15 = vector.extract_strided_slice %13 {offsets = [0, 8, 0], sizes = [8, 8, 1], strides = [1, 1, 1]} : vector<8x32x1xf32> to vector<8x8x1xf32>
    %16 = arith.maximumf %14, %15 : vector<8x8x1xf32>
    %17 = vector.extract_strided_slice %13 {offsets = [0, 16, 0], sizes = [8, 8, 1], strides = [1, 1, 1]} : vector<8x32x1xf32> to vector<8x8x1xf32>
    %18 = arith.maximumf %16, %17 : vector<8x8x1xf32>
    %19 = vector.extract_strided_slice %13 {offsets = [0, 24, 0], sizes = [8, 8, 1], strides = [1, 1, 1]} : vector<8x32x1xf32> to vector<8x8x1xf32>
    %20 = arith.maximumf %18, %19 : vector<8x8x1xf32>
    %21 = tpu.concatenate %20, %20, %20, %20 in 1 : vector<8x8x1xf32>, vector<8x8x1xf32>, vector<8x8x1xf32>, vector<8x8x1xf32> -> vector<8x32x1xf32>
    %22 = vector.broadcast %21 : vector<8x32x1xf32> to vector<8x32x175xf32>
    %23 = arith.subf %11, %22 : vector<8x32x175xf32>
    %24 = math.exp %23 : vector<8x32x175xf32>
    %cst_9 = arith.constant dense<0.000000e+00> : vector<8x32xf32>
    %25 = vector.multi_reduction <add>, %24, %cst_9 [2] : vector<8x32x175xf32> to vector<8x32xf32>
    %26 = vector.shape_cast %25 : vector<8x32xf32> to vector<8x32x1xf32>
    %27 = vector.extract_strided_slice %26 {offsets = [0, 0, 0], sizes = [8, 8, 1], strides = [1, 1, 1]} : vector<8x32x1xf32> to vector<8x8x1xf32>
    %28 = vector.extract_strided_slice %26 {offsets = [0, 8, 0], sizes = [8, 8, 1], strides = [1, 1, 1]} : vector<8x32x1xf32> to vector<8x8x1xf32>
    %29 = arith.addf %27, %28 : vector<8x8x1xf32>
    %30 = vector.extract_strided_slice %26 {offsets = [0, 16, 0], sizes = [8, 8, 1], strides = [1, 1, 1]} : vector<8x32x1xf32> to vector<8x8x1xf32>
    %31 = arith.addf %29, %30 : vector<8x8x1xf32>
    %32 = vector.extract_strided_slice %26 {offsets = [0, 24, 0], sizes = [8, 8, 1], strides = [1, 1, 1]} : vector<8x32x1xf32> to vector<8x8x1xf32>
    %33 = arith.addf %31, %32 : vector<8x8x1xf32>
    %34 = tpu.concatenate %33, %33, %33, %33 in 1 : vector<8x8x1xf32>, vector<8x8x1xf32>, vector<8x8x1xf32>, vector<8x8x1xf32> -> vector<8x32x1xf32>
    %35 = tpu.reciprocal %34 {approx = true} : vector<8x32x1xf32> -> vector<8x32x1xf32>
    %36 = vector.broadcast %35 : vector<8x32x1xf32> to vector<8x32x175xf32>
    %37 = arith.mulf %24, %36 : vector<8x32x175xf32>
    %cst_10 = arith.constant dense<0.000000e+00> : vector<8x32x128xf32>
    %38 = tpu.matmul %37, %0, %cst_10 {dimension_numbers = #tpu.dot_dimension_numbers<[2], [1], [1], [2], [0, 0, 0, 1, 1, 2], [0], [0]>} : vector<8x32x175xf32>, vector<8x175x128xf32>, vector<8x32x128xf32> -> vector<8x32x128xf32>
    %39 = vector.extract_strided_slice %38 {offsets = [0, 0, 0], sizes = [8, 8, 32], strides = [1, 1, 1]} : vector<8x32x128xf32> to vector<8x8x32xf32>
    %40 = vector.extract_strided_slice %38 {offsets = [0, 8, 32], sizes = [8, 8, 32], strides = [1, 1, 1]} : vector<8x32x128xf32> to vector<8x8x32xf32>
    %41 = arith.addf %39, %40 : vector<8x8x32xf32>
    %42 = vector.extract_strided_slice %38 {offsets = [0, 16, 64], sizes = [8, 8, 32], strides = [1, 1, 1]} : vector<8x32x128xf32> to vector<8x8x32xf32>
    %43 = arith.addf %41, %42 : vector<8x8x32xf32>
    %44 = vector.extract_strided_slice %38 {offsets = [0, 24, 96], sizes = [8, 8, 32], strides = [1, 1, 1]} : vector<8x32x128xf32> to vector<8x8x32xf32>
    %45 = arith.addf %43, %44 : vector<8x8x32xf32>
    %46 = vector.shape_cast %45 : vector<8x8x32xf32> to vector<8x256xf32>
    %c0_11 = arith.constant 0 : index
    %c0_12 = arith.constant 0 : index
    %47 = vector.load %arg4[%c0_11, %c0_12] : memref<256x32xf32, #tpu.memory_space<vmem>>, vector<256x32xf32>
    %cst_13 = arith.constant dense<0.000000e+00> : vector<8x32xf32>
    %48 = tpu.matmul %46, %47, %cst_13 {dimension_numbers = #tpu.dot_dimension_numbers<[1], [0], [0], [1], [0, 0, 1, 1], [], []>} : vector<8x256xf32>, vector<256x32xf32>, vector<8x32xf32> -> vector<8x32xf32>
    %c0_14 = arith.constant 0 : index
    %c0_15 = arith.constant 0 : index
    %49 = vector.load %arg5[%c0_14, %c0_15] : memref<1x32xf32, #tpu.memory_space<vmem>>, vector<1x32xf32>
    %50 = vector.broadcast %49 : vector<1x32xf32> to vector<8x32xf32>
    %51 = arith.addf %48, %50 : vector<8x32xf32>
    %c0_16 = arith.constant 0 : index
    %c0_17 = arith.constant 0 : index
    %52 = vector.load %arg6[%c0_16, %c0_17] : memref<8x32xf32, #tpu.memory_space<vmem>>, vector<8x32xf32>
    tpu.vector_store %arg6[%c0_16, %c0_17], %51 {strides = array<i32>} : memref<8x32xf32, #tpu.memory_space<vmem>>, vector<8x32xf32>,
    return
  }
  func.func @transform_0(%arg0: i32) -> (i32, i32) {
    %c0_i32 = arith.constant 0 : i32
    %c0_i32_0 = arith.constant 0 : i32
    return %arg0, %c0_i32 : i32, i32
  }
  func.func @transform_1(%arg0: i32) -> (i32, i32, i32) {
    %c0_i32 = arith.constant 0 : i32
    %c0_i32_0 = arith.constant 0 : i32
    %c0_i32_1 = arith.constant 0 : i32
    return %arg0, %c0_i32, %c0_i32_0 : i32, i32, i32
  }
  func.func @transform_2(%arg0: i32) -> (i32, i32) {
    %c0_i32 = arith.constant 0 : i32
    %c0_i32_0 = arith.constant 0 : i32
    %c0_i32_1 = arith.constant 0 : i32
    return %c0_i32, %c0_i32_0 : i32, i32
  }
  func.func @transform_3(%arg0: i32) -> (i32, i32) {
    %c0_i32 = arith.constant 0 : i32
    %c0_i32_0 = arith.constant 0 : i32
    %c0_i32_1 = arith.constant 0 : i32
    return %c0_i32, %c0_i32_0 : i32, i32
  }
  func.func @transform_4(%arg0: i32) -> (i32, i32) {
    %c0_i32 = arith.constant 0 : i32
    %c0_i32_0 = arith.constant 0 : i32
    %c0_i32_1 = arith.constant 0 : i32
    return %c0_i32, %c0_i32_0 : i32, i32
  }
  func.func @transform_5(%arg0: i32) -> (i32, i32) {
    %c0_i32 = arith.constant 0 : i32
    %c0_i32_0 = arith.constant 0 : i32
    return %arg0, %c0_i32 : i32, i32
  }
}

</mosaic_0001>

<llo_original>
// kernel: tpu_custom_call.1
$region0: #{tpu_custom_call.1}
  #allocation0 [shape = 'u32[]', space=smem, size = 0x4, offset = 0x4, fixed_abs, tag = 'smem constant byte address 0x4 - core index']
  #allocation1 [shape = 'u32[144,128]{1,0:T(1,128)}', space=vmem, size = 0x12000, scoped, tag = 'internal scratch']
  %s0 = inlined_call_operand.vmem [shape: f32[8,32], index: 0, kind: input, shape index: {}]
  %s1 = inlined_call_operand.vmem [shape: f32[8,175,128], index: 1, kind: input, shape index: {}]
  %s2 = inlined_call_operand.vmem [shape: f32[32,256], index: 2, kind: input, shape index: {}]
  %s3 = inlined_call_operand.vmem [shape: f32[256,32], index: 3, kind: input, shape index: {}]
  %s4 = inlined_call_operand.vmem [shape: f32[1,32], index: 4, kind: input, shape index: {}]
  %s5 = inlined_call_operand.hbm [shape: f32[8,32], index: 5, kind: output, shape index: {}]
  %s6 = sld [smem:[#allocation0]]
  $region30: #{tpu_custom_call.1} parent=0
    _
  %s8 = ssub.s32 1, %s6
  %s9 = scalar_select 0, %s8, %s6
  $region1: #{tpu_custom_call.1} parent=0
    #allocation2 [shape = 'u8[4096]{0}', space=vmem, size = 0x1000, scoped, tag = 'output window, operand 0, single buffered']
    #allocation3 [shape = 's32[1]{0}', space=sflag, size = 0x4, scoped, tag = 'scoped memory for tpu_custom_call.1']
    %10 = vsyncpa [#allocation3], 0
    // Predicated region
    $region2: #{tpu_custom_call.1} parent=1 // pred_check
      _
    $region3: #{tpu_custom_call.1} parent=1 // pred_check_branch
      %12 = sbr.rel (0) target = $region5
    $region4: #{tpu_custom_call.1} parent=1 // pred_region
      _
    $region5: #{tpu_custom_call.1} parent=1 // pred_fallthru
      _
    // Predicated region
    $region6: #{tpu_custom_call.1} parent=1 // pred_check
      _
    $region7: #{tpu_custom_call.1} parent=1 // pred_check_branch
      %14 = sbr.rel (0) target = $region9
    $region8: #{tpu_custom_call.1} parent=1 // pred_region
      _
    $region9: #{tpu_custom_call.1} parent=1 // pred_fallthru
      _
    // Predicated region
    $region10: #{tpu_custom_call.1} parent=1 // pred_check
      _
    $region11: #{tpu_custom_call.1} parent=1 // pred_check_branch
      %16 = sbr.rel (0) target = $region13
    $region12: #{tpu_custom_call.1} parent=1 // pred_region
      _
    $region13: #{tpu_custom_call.1} parent=1 // pred_fallthru
      _
    // Predicated region
    $region14: #{tpu_custom_call.1} parent=1 // pred_check
      _
    $region15: #{tpu_custom_call.1} parent=1 // pred_check_branch
      %18 = sbr.rel (0) target = $region17
    $region16: #{tpu_custom_call.1} parent=1 // pred_region
      _
    $region17: #{tpu_custom_call.1} parent=1 // pred_fallthru
      _
    // Predicated region
    $region18: #{tpu_custom_call.1} parent=1 // pred_check
      _
    $region19: #{tpu_custom_call.1} parent=1 // pred_check_branch
      %20 = sbr.rel (0) target = $region21
    $region20: #{tpu_custom_call.1} parent=1 // pred_region
      _
    $region21: #{tpu_custom_call.1} parent=1 // pred_fallthru
      _
    %v21 = vld [vmem:[%s1] sm:$0xff]
    %v22 = vld [vmem:[%s1 + $0x8] sm:$0xff]
    %v23 = vld [vmem:[%s1 + $0x10] sm:$0xff]
    %v24 = vld [vmem:[%s1 + $0x18] sm:$0xff]
    %v25 = vld [vmem:[%s1 + $0x20] sm:$0xff]
    %v26 = vld [vmem:[%s1 + $0x28] sm:$0xff]
    %v27 = vld [vmem:[%s1 + $0x30] sm:$0xff]
    %v28 = vld [vmem:[%s1 + $0x38] sm:$0xff]
    %v29 = vld [vmem:[%s1 + $0x40] sm:$0xff]
    %v30 = vld [vmem:[%s1 + $0x48] sm:$0xff]
    %v31 = vld [vmem:[%s1 + $0x50] sm:$0xff]
    %v32 = vld [vmem:[%s1 + $0x58] sm:$0xff]
    %v33 = vld [vmem:[%s1 + $0x60] sm:$0xff]
    %v34 = vld [vmem:[%s1 + $0x68] sm:$0xff]
    %v35 = vld [vmem:[%s1 + $0x70] sm:$0xff]
    %v36 = vld [vmem:[%s1 + $0x78] sm:$0xff]
    %v37 = vld [vmem:[%s1 + $0x80] sm:$0xff]
    %v38 = vld [vmem:[%s1 + $0x88] sm:$0xff]
    %v39 = vld [vmem:[%s1 + $0x90] sm:$0xff]
    %v40 = vld [vmem:[%s1 + $0x98] sm:$0xff]
    %v41 = vld [vmem:[%s1 + $0xa0] sm:$0xff]
    %v42 = vld [vmem:[%s1 + $0xa8] sm:$0x7f]
    %v43 = vld [vmem:[%s1 + $0xb0] sm:$0xff]
    %v44 = vld [vmem:[%s1 + $0xb8] sm:$0xff]
    %v45 = vld [vmem:[%s1 + $0xc0] sm:$0xff]
    %v46 = vld [vmem:[%s1 + $0xc8] sm:$0xff]
    %v47 = vld [vmem:[%s1 + $0xd0] sm:$0xff]
    %v48 = vld [vmem:[%s1 + $0xd8] sm:$0xff]
    %v49 = vld [vmem:[%s1 + $0xe0] sm:$0xff]
    %v50 = vld [vmem:[%s1 + $0xe8] sm:$0xff]
    %v51 = vld [vmem:[%s1 + $0xf0] sm:$0xff]
    %v52 = vld [vmem:[%s1 + $0xf8] sm:$0xff]
    %v53 = vld [vmem:[%s1 + $0x100] sm:$0xff]
    %v54 = vld [vmem:[%s1 + $0x108] sm:$0xff]
    %v55 = vld [vmem:[%s1 + $0x110] sm:$0xff]
    %v56 = vld [vmem:[%s1 + $0x118] sm:$0xff]
    %v57 = vld [vmem:[%s1 + $0x120] sm:$0xff]
    %v58 = vld [vmem:[%s1 + $0x128] sm:$0xff]
    %v59 = vld [vmem:[%s1 + $0x130] sm:$0xff]
    %v60 = vld [vmem:[%s1 + $0x138] sm:$0xff]
    %v61 = vld [vmem:[%s1 + $0x140] sm:$0xff]
    %v62 = vld [vmem:[%s1 + $0x148] sm:$0xff]
    %v63 = vld [vmem:[%s1 + $0x150] sm:$0xff]
    %v64 = vld [vmem:[%s1 + $0x158] sm:$0x7f]
    %v65 = vld [vmem:[%s1 + $0x160] sm:$0xff]
    %v66 = vld [vmem:[%s1 + $0x168] sm:$0xff]
    %v67 = vld [vmem:[%s1 + $0x170] sm:$0xff]
    %v68 = vld [vmem:[%s1 + $0x178] sm:$0xff]
    %v69 = vld [vmem:[%s1 + $0x180] sm:$0xff]
    %v70 = vld [vmem:[%s1 + $0x188] sm:$0xff]
    %v71 = vld [vmem:[%s1 + $0x190] sm:$0xff]
    %v72 = vld [vmem:[%s1 + $0x198] sm:$0xff]
    %v73 = vld [vmem:[%s1 + $0x1a0] sm:$0xff]
    %v74 = vld [vmem:[%s1 + $0x1a8] sm:$0xff]
    %v75 = vld [vmem:[%s1 + $0x1b0] sm:$0xff]
    %v76 = vld [vmem:[%s1 + $0x1b8] sm:$0xff]
    %v77 = vld [vmem:[%s1 + $0x1c0] sm:$0xff]
    %v78 = vld [vmem:[%s1 + $0x1c8] sm:$0xff]
    %v79 = vld [vmem:[%s1 + $0x1d0] sm:$0xff]
    %v80 = vld [vmem:[%s1 + $0x1d8] sm:$0xff]
    %v81 = vld [vmem:[%s1 + $0x1e0] sm:$0xff]
    %v82 = vld [vmem:[%s1 + $0x1e8] sm:$0xff]
    %v83 = vld [vmem:[%s1 + $0x1f0] sm:$0xff]
    %v84 = vld [vmem:[%s1 + $0x1f8] sm:$0xff]
    %v85 = vld [vmem:[%s1 + $0x200] sm:$0xff]
    %v86 = vld [vmem:[%s1 + $0x208] sm:$0x7f]
    %v87 = vld [vmem:[%s1 + $0x210] sm:$0xff]
    %v88 = vld [vmem:[%s1 + $0x218] sm:$0xff]
    %v89 = vld [vmem:[%s1 + $0x220] sm:$0xff]
    %v90 = vld [vmem:[%s1 + $0x228] sm:$0xff]
    %v91 = vld [vmem:[%s1 + $0x230] sm:$0xff]
    %v92 = vld [vmem:[%s1 + $0x238] sm:$0xff]
    %v93 = vld [vmem:[%s1 + $0x240] sm:$0xff]
    %v94 = vld [vmem:[%s1 + $0x248] sm:$0xff]
    %v95 = vld [vmem:[%s1 + $0x250] sm:$0xff]
    %v96 = vld [vmem:[%s1 + $0x258] sm:$0xff]
    %v97 = vld [vmem:[%s1 + $0x260] sm:$0xff]
    %v98 = vld [vmem:[%s1 + $0x268] sm:$0xff]
    %v99 = vld [vmem:[%s1 + $0x270] sm:$0xff]
    %v100 = vld [vmem:[%s1 + $0x278] sm:$0xff]
    %v101 = vld [vmem:[%s1 + $0x280] sm:$0xff]
    %v102 = vld [vmem:[%s1 + $0x288] sm:$0xff]
    %v103 = vld [vmem:[%s1 + $0x290] sm:$0xff]
    %v104 = vld [vmem:[%s1 + $0x298] sm:$0xff]
    %v105 = vld [vmem:[%s1 + $0x2a0] sm:$0xff]
    %v106 = vld [vmem:[%s1 + $0x2a8] sm:$0xff]
    %v107 = vld [vmem:[%s1 + $0x2b0] sm:$0xff]
    %v108 = vld [vmem:[%s1 + $0x2b8] sm:$0x7f]
    %v109 = vld [vmem:[%s1 + $0x2c0] sm:$0xff]
    %v110 = vld [vmem:[%s1 + $0x2c8] sm:$0xff]
    %v111 = vld [vmem:[%s1 + $0x2d0] sm:$0xff]
    %v112 = vld [vmem:[%s1 + $0x2d8] sm:$0xff]
    %v113 = vld [vmem:[%s1 + $0x2e0] sm:$0xff]
    %v114 = vld [vmem:[%s1 + $0x2e8] sm:$0xff]
    %v115 = vld [vmem:[%s1 + $0x2f0] sm:$0xff]
    %v116 = vld [vmem:[%s1 + $0x2f8] sm:$0xff]
    %v117 = vld [vmem:[%s1 + $0x300] sm:$0xff]
    %v118 = vld [vmem:[%s1 + $0x308] sm:$0xff]
    %v119 = vld [vmem:[%s1 + $0x310] sm:$0xff]
    %v120 = vld [vmem:[%s1 + $0x318] sm:$0xff]
    %v121 = vld [vmem:[%s1 + $0x320] sm:$0xff]
    %v122 = vld [vmem:[%s1 + $0x328] sm:$0xff]
    %v123 = vld [vmem:[%s1 + $0x330] sm:$0xff]
    %v124 = vld [vmem:[%s1 + $0x338] sm:$0xff]
    %v125 = vld [vmem:[%s1 + $0x340] sm:$0xff]
    %v126 = vld [vmem:[%s1 + $0x348] sm:$0xff]
    %v127 = vld [vmem:[%s1 + $0x350] sm:$0xff]
    %v128 = vld [vmem:[%s1 + $0x358] sm:$0xff]
    %v129 = vld [vmem:[%s1 + $0x360] sm:$0xff]
    %v130 = vld [vmem:[%s1 + $0x368] sm:$0x7f]
    %v131 = vld [vmem:[%s1 + $0x370] sm:$0xff]
    %v132 = vld [vmem:[%s1 + $0x378] sm:$0xff]
    %v133 = vld [vmem:[%s1 + $0x380] sm:$0xff]
    %v134 = vld [vmem:[%s1 + $0x388] sm:$0xff]
    %v135 = vld [vmem:[%s1 + $0x390] sm:$0xff]
    %v136 = vld [vmem:[%s1 + $0x398] sm:$0xff]
    %v137 = vld [vmem:[%s1 + $0x3a0] sm:$0xff]
    %v138 = vld [vmem:[%s1 + $0x3a8] sm:$0xff]
    %v139 = vld [vmem:[%s1 + $0x3b0] sm:$0xff]
    %v140 = vld [vmem:[%s1 + $0x3b8] sm:$0xff]
    %v141 = vld [vmem:[%s1 + $0x3c0] sm:$0xff]
    %v142 = vld [vmem:[%s1 + $0x3c8] sm:$0xff]
    %v143 = vld [vmem:[%s1 + $0x3d0] sm:$0xff]
    %v144 = vld [vmem:[%s1 + $0x3d8] sm:$0xff]
    %v145 = vld [vmem:[%s1 + $0x3e0] sm:$0xff]
    %v146 = vld [vmem:[%s1 + $0x3e8] sm:$0xff]
    %v147 = vld [vmem:[%s1 + $0x3f0] sm:$0xff]
    %v148 = vld [vmem:[%s1 + $0x3f8] sm:$0xff]
    %v149 = vld [vmem:[%s1 + $0x400] sm:$0xff]
    %v150 = vld [vmem:[%s1 + $0x408] sm:$0xff]
    %v151 = vld [vmem:[%s1 + $0x410] sm:$0xff]
    %v152 = vld [vmem:[%s1 + $0x418] sm:$0x7f]
    %v153 = vld [vmem:[%s1 + $0x420] sm:$0xff]
    %v154 = vld [vmem:[%s1 + $0x428] sm:$0xff]
    %v155 = vld [vmem:[%s1 + $0x430] sm:$0xff]
    %v156 = vld [vmem:[%s1 + $0x438] sm:$0xff]
    %v157 = vld [vmem:[%s1 + $0x440] sm:$0xff]
    %v158 = vld [vmem:[%s1 + $0x448] sm:$0xff]
    %v159 = vld [vmem:[%s1 + $0x450] sm:$0xff]
    %v160 = vld [vmem:[%s1 + $0x458] sm:$0xff]
    %v161 = vld [vmem:[%s1 + $0x460] sm:$0xff]
    %v162 = vld [vmem:[%s1 + $0x468] sm:$0xff]
    %v163 = vld [vmem:[%s1 + $0x470] sm:$0xff]
    %v164 = vld [vmem:[%s1 + $0x478] sm:$0xff]
    %v165 = vld [vmem:[%s1 + $0x480] sm:$0xff]
    %v166 = vld [vmem:[%s1 + $0x488] sm:$0xff]
    %v167 = vld [vmem:[%s1 + $0x490] sm:$0xff]
    %v168 = vld [vmem:[%s1 + $0x498] sm:$0xff]
    %v169 = vld [vmem:[%s1 + $0x4a0] sm:$0xff]
    %v170 = vld [vmem:[%s1 + $0x4a8] sm:$0xff]
    %v171 = vld [vmem:[%s1 + $0x4b0] sm:$0xff]
    %v172 = vld [vmem:[%s1 + $0x4b8] sm:$0xff]
    %v173 = vld [vmem:[%s1 + $0x4c0] sm:$0xff]
    %v174 = vld [vmem:[%s1 + $0x4c8] sm:$0x7f]
    %v175 = vld [vmem:[%s1 + $0x4d0] sm:$0xff]
    %v176 = vld [vmem:[%s1 + $0x4d8] sm:$0xff]
    %v177 = vld [vmem:[%s1 + $0x4e0] sm:$0xff]
    %v178 = vld [vmem:[%s1 + $0x4e8] sm:$0xff]
    %v179 = vld [vmem:[%s1 + $0x4f0] sm:$0xff]
    %v180 = vld [vmem:[%s1 + $0x4f8] sm:$0xff]
    %v181 = vld [vmem:[%s1 + $0x500] sm:$0xff]
    %v182 = vld [vmem:[%s1 + $0x508] sm:$0xff]
    %v183 = vld [vmem:[%s1 + $0x510] sm:$0xff]
    %v184 = vld [vmem:[%s1 + $0x518] sm:$0xff]
    %v185 = vld [vmem:[%s1 + $0x520] sm:$0xff]
    %v186 = vld [vmem:[%s1 + $0x528] sm:$0xff]
    %v187 = vld [vmem:[%s1 + $0x530] sm:$0xff]
    %v188 = vld [vmem:[%s1 + $0x538] sm:$0xff]
    %v189 = vld [vmem:[%s1 + $0x540] sm:$0xff]
    %v190 = vld [vmem:[%s1 + $0x548] sm:$0xff]
    %v191 = vld [vmem:[%s1 + $0x550] sm:$0xff]
    %v192 = vld [vmem:[%s1 + $0x558] sm:$0xff]
    %v193 = vld [vmem:[%s1 + $0x560] sm:$0xff]
    %v194 = vld [vmem:[%s1 + $0x568] sm:$0xff]
    %v195 = vld [vmem:[%s1 + $0x570] sm:$0xff]
    %v196 = vld [vmem:[%s1 + $0x578] sm:$0x7f]
    %v197 = vld [vmem:[%s0] sm:$0xff]
    %v198 = vld [vmem:[%s2] sm:$0xff]
    %v199 = vld [vmem:[%s2 + $0x8] sm:$0xff]
    %v200 = vld [vmem:[%s2 + $0x10] sm:$0xff]
    %v201 = vld [vmem:[%s2 + $0x18] sm:$0xff]
    %v202 = vld [vmem:[%s2 + $0x20] sm:$0xff]
    %v203 = vld [vmem:[%s2 + $0x28] sm:$0xff]
    %v204 = vld [vmem:[%s2 + $0x30] sm:$0xff]
    %v205 = vld [vmem:[%s2 + $0x38] sm:$0xff]
    %vm206 = vcmask 261120
    %v208 = vsel %vm206, %v197, 0
    %210 = vmatprep.subr.mxu0 0.0
    %211 = vmatpush1.msra.mxu0 0.0
    %212 = vmatprep.subr.mxu0 0.0
    %213 = vmatpush1.msra.mxu0 0.0
    %214 = vmatprep.subr.mxu0 0.0
    %215 = vmatpush1.msra.mxu0 0.0
    %216 = vmatprep.subr.mxu0 0.0
    %217 = vmatpush1.msra.mxu0 0.0
    %218 = vmatprep.subr.mxu0 0.0
    %219 = vmatpush1.msra.mxu0 0.0
    %220 = vmatprep.subr.mxu0 0.0
    %221 = vmatpush1.msra.mxu0 0.0
    %222 = vmatprep.subr.mxu0 0.0
    %223 = vmatpush1.msra.mxu0 0.0
    %224 = vmatprep.subr.mxu0 0.0
    %225 = vmatpush1.msra.mxu0 0.0
    %226 = vmatprep.subr.mxu0 0.0
    %227 = vmatpush1.msra.mxu0 0.0
    %228 = vmatprep.subr.mxu0 0.0
    %229 = vmatpush1.msra.mxu0 0.0
    %230 = vmatprep.subr.mxu0 0.0
    %231 = vmatpush1.msra.mxu0 0.0
    %232 = vmatprep.subr.mxu0 0.0
    %233 = vmatpush1.msra.mxu0 0.0
    %234 = vmatprep.subr.mxu0 %v205
    %235 = vmatpush1.msra.mxu0 %v204
    %236 = vmatprep.subr.mxu0 %v203
    %237 = vmatpush1.msra.mxu0 %v202
    %238 = vmatprep.subr.mxu0 %v201
    %239 = vmatpush1.msra.mxu0 %v200
    %240 = vmatprep.subr.mxu0 %v199
    %241 = vmatpush1.msra.mxu0 %v198
    %242 = vmatprep.subr.mxu0 0.0
    %243 = vmatpush2.msra.mxu0 0.0
    %244 = vmatprep.subr.mxu0 0.0
    %245 = vmatpush2.msra.mxu0 0.0
    %246 = vmatprep.subr.mxu0 0.0
    %247 = vmatpush2.msra.mxu0 0.0
    %248 = vmatprep.subr.mxu0 0.0
    %249 = vmatpush2.msra.mxu0 0.0
    %250 = vmatprep.subr.mxu0 0.0
    %251 = vmatpush2.msra.mxu0 0.0
    %252 = vmatprep.subr.mxu0 0.0
    %253 = vmatpush2.msra.mxu0 0.0
    %254 = vmatprep.subr.mxu0 0.0
    %255 = vmatpush2.msra.mxu0 0.0
    %256 = vmatprep.subr.mxu0 0.0
    %257 = vmatpush2.msra.mxu0 0.0
    %258 = vmatprep.subr.mxu0 0.0
    %259 = vmatpush2.msra.mxu0 0.0
    %260 = vmatprep.subr.mxu0 0.0
    %261 = vmatpush2.msra.mxu0 0.0
    %262 = vmatprep.subr.mxu0 0.0
    %263 = vmatpush2.msra.mxu0 0.0
    %264 = vmatprep.subr.mxu0 0.0
    %265 = vmatpush2.msra.mxu0 0.0
    %266 = vmatprep.subr.mxu0 0.0
    %267 = vmatpush2.msra.mxu0 0.0
    %268 = vmatprep.subr.mxu0 0.0
    %269 = vmatpush2.msra.mxu0 0.0
    %270 = vmatprep.subr.mxu0 0.0
    %271 = vmatpush2.msra.mxu0 0.0
    %272 = vmatprep.subr.mxu0 0.0
    %273 = vmatpush2.msra.mxu0 0.0
    %274 = vmatprep.mubr.f32.mxu0 0.0
    %275 = vmatmul.mubr.f32.gmra.mxu0 %v208
    %v276 = vpop.f32.mrf.mxu0
    %v277 = vadd.f32 0.0, %v276
    %v278 = vpop.f32.mrf.mxu0
    %v279 = vadd.f32 0.0, %v278
    %280 = vdwg.mxu0
    %282 = vrot.lane.b32.xlu0 %v277, 96
    %v283 = vpop.permute.xlu0 %282
    %285 = vrot.lane.b32.xlu0 %v277, 64
    %v286 = vpop.permute.xlu0 %285
    %288 = vrot.lane.b32.xlu0 %v277, 32
    %v289 = vpop.permute.xlu0 %288
    %292 = vrot.lane.b32.xlu0 %v279, 96
    %v293 = vpop.permute.xlu0 %292
    %295 = vrot.lane.b32.xlu0 %v279, 64
    %v296 = vpop.permute.xlu0 %295
    %298 = vrot.lane.b32.xlu0 %v279, 32
    %v299 = vpop.permute.xlu0 %298
    %v301 = vcombine.low %v277, %v286
    %v302 = vcombine.high %v277, %v286
    %v304 = vunpack.c.l.s4 1983009808
    %v305 = vunpack.c.0.s8 %v304
    %v306 = vlaneseq
    %v307 = vshrl.u32 %v306, 7
    %v308 = vsub.s32 %v305, %v307
    %v309 = vrot.slane %v301, %v308
    %v311 = vunpack.c.l.s4 1983009808
    %v312 = vunpack.c.0.s8 %v311
    %v313 = vlaneseq
    %v314 = vshrl.u32 %v313, 7
    %v315 = vsub.s32 %v312, %v314
    %v316 = vrot.slane %v302, %v315
    %v317 = vcombine.low %v283, %v289
    %v318 = vcombine.high %v283, %v289
    %v320 = vunpack.c.l.s4 1983009808
    %v321 = vunpack.c.0.s8 %v320
    %v322 = vlaneseq
    %v323 = vshrl.u32 %v322, 7
    %v324 = vsub.s32 %v321, %v323
    %v325 = vrot.slane %v317, %v324
    %v327 = vunpack.c.l.s4 1983009808
    %v328 = vunpack.c.0.s8 %v327
    %v329 = vlaneseq
    %v330 = vshrl.u32 %v329, 7
    %v331 = vsub.s32 %v328, %v330
    %v332 = vrot.slane %v318, %v331
    %v333 = vcombine.low %v279, %v296
    %v334 = vcombine.high %v279, %v296
    %v336 = vunpack.c.l.s4 1983009808
    %v337 = vunpack.c.0.s8 %v336
    %v338 = vlaneseq
    %v339 = vshrl.u32 %v338, 7
    %v340 = vsub.s32 %v337, %v339
    %v341 = vrot.slane %v333, %v340
    %v343 = vunpack.c.l.s4 1983009808
    %v344 = vunpack.c.0.s8 %v343
    %v345 = vlaneseq
    %v346 = vshrl.u32 %v345, 7
    %v347 = vsub.s32 %v344, %v346
    %v348 = vrot.slane %v334, %v347
    %v349 = vcombine.low %v293, %v299
    %v350 = vcombine.high %v293, %v299
    %v352 = vunpack.c.l.s4 1983009808
    %v353 = vunpack.c.0.s8 %v352
    %v354 = vlaneseq
    %v355 = vshrl.u32 %v354, 7
    %v356 = vsub.s32 %v353, %v355
    %v357 = vrot.slane %v349, %v356
    %v359 = vunpack.c.l.s4 1983009808
    %v360 = vunpack.c.0.s8 %v359
    %v361 = vlaneseq
    %v362 = vshrl.u32 %v361, 7
    %v363 = vsub.s32 %v360, %v362
    %v364 = vrot.slane %v350, %v363
    %v365 = vcombine.low %v309, %v325
    %v366 = vcombine.high %v309, %v325
    %v368 = vunpack.c.l.s4 1934713408
    %v369 = vunpack.c.0.s8 %v368
    %v370 = vlaneseq
    %v371 = vshrl.u32 %v370, 7
    %v372 = vsub.s32 %v369, %v371
    %v373 = vrot.slane %v365, %v372
    %v375 = vunpack.c.l.s4 1934713408
    %v376 = vunpack.c.0.s8 %v375
    %v377 = vlaneseq
    %v378 = vshrl.u32 %v377, 7
    %v379 = vsub.s32 %v376, %v378
    %v380 = vrot.slane %v366, %v379
    %v381 = vcombine.low %v316, %v332
    %v382 = vcombine.high %v316, %v332
    %v384 = vunpack.c.l.s4 1934713408
    %v385 = vunpack.c.0.s8 %v384
    %v386 = vlaneseq
    %v387 = vshrl.u32 %v386, 7
    %v388 = vsub.s32 %v385, %v387
    %v389 = vrot.slane %v381, %v388
    %v391 = vunpack.c.l.s4 1934713408
    %v392 = vunpack.c.0.s8 %v391
    %v393 = vlaneseq
    %v394 = vshrl.u32 %v393, 7
    %v395 = vsub.s32 %v392, %v394
    %v396 = vrot.slane %v382, %v395
    %v397 = vcombine.low %v341, %v357
    %v398 = vcombine.high %v341, %v357
    %v400 = vunpack.c.l.s4 1934713408
    %v401 = vunpack.c.0.s8 %v400
    %v402 = vlaneseq
    %v403 = vshrl.u32 %v402, 7
    %v404 = vsub.s32 %v401, %v403
    %v405 = vrot.slane %v397, %v404
    %v407 = vunpack.c.l.s4 1934713408
    %v408 = vunpack.c.0.s8 %v407
    %v409 = vlaneseq
    %v410 = vshrl.u32 %v409, 7
    %v411 = vsub.s32 %v408, %v410
    %v412 = vrot.slane %v398, %v411
    %v413 = vcombine.low %v348, %v364
    %v414 = vcombine.high %v348, %v364
    %v416 = vunpack.c.l.s4 1934713408
    %v417 = vunpack.c.0.s8 %v416
    %v418 = vlaneseq
    %v419 = vshrl.u32 %v418, 7
    %v420 = vsub.s32 %v417, %v419
    %v421 = vrot.slane %v413, %v420
    %v423 = vunpack.c.l.s4 1934713408
    %v424 = vunpack.c.0.s8 %v423
    %v425 = vlaneseq
    %v426 = vshrl.u32 %v425, 7
    %v427 = vsub.s32 %v424, %v426
    %v428 = vrot.slane %v414, %v427
    %v429 = vcombine.low %v373, %v405
    %v430 = vcombine.high %v373, %v405
    %v431 = vcombine.low %v380, %v412
    %v432 = vcombine.high %v380, %v412
    %v433 = vcombine.low %v389, %v421
    %v434 = vcombine.high %v389, %v421
    %v435 = vcombine.low %v396, %v428
    %v436 = vcombine.high %v396, %v428
    %v437 = vsel %vm206, %v429, 0.0
    %v438 = vsel %vm206, %v430, 0.0
    %v439 = vsel %vm206, %v431, 0.0
    %v440 = vsel %vm206, %v432, 0.0
    %v441 = vsel %vm206, %v433, 0.0
    %v442 = vsel %vm206, %v434, 0.0
    %v443 = vsel %vm206, %v435, 0.0
    %v444 = vsel %vm206, %v436, 0.0
    %vm445 = vcmask 523264
    %v446 = vsel %vm445, %v437, 0.0
    %v447 = vsel %vm445, %v438, 0.0
    %v448 = vsel %vm445, %v439, 0.0
    %v449 = vsel %vm445, %v440, 0.0
    %v450 = vsel %vm445, %v441, 0.0
    %v451 = vsel %vm445, %v442, 0.0
    %v452 = vsel %vm445, %v443, 0.0
    %v453 = vsel %vm445, %v444, 0.0
    %vm454 = vcmask 785408
    %v455 = vsel %vm454, %v446, 0.0
    %v456 = vsel %vm454, %v447, 0.0
    %v457 = vsel %vm454, %v448, 0.0
    %v458 = vsel %vm454, %v449, 0.0
    %v459 = vsel %vm454, %v450, 0.0
    %v460 = vsel %vm454, %v451, 0.0
    %v461 = vsel %vm454, %v452, 0.0
    %v462 = vsel %vm454, %v453, 0.0
    %471 = vrot.lane.b32.xlu0 %v429, 32
    %v472 = vpop.permute.xlu0 %471
    %473 = vrot.lane.b32.xlu0 %v430, 32
    %v474 = vpop.permute.xlu0 %473
    %475 = vrot.lane.b32.xlu0 %v431, 32
    %v476 = vpop.permute.xlu0 %475
    %477 = vrot.lane.b32.xlu0 %v432, 32
    %v478 = vpop.permute.xlu0 %477
    %479 = vrot.lane.b32.xlu0 %v433, 32
    %v480 = vpop.permute.xlu0 %479
    %481 = vrot.lane.b32.xlu0 %v434, 32
    %v482 = vpop.permute.xlu0 %481
    %483 = vrot.lane.b32.xlu0 %v435, 32
    %v484 = vpop.permute.xlu0 %483
    %485 = vrot.lane.b32.xlu0 %v436, 32
    %v486 = vpop.permute.xlu0 %485
    %v495 = vsel %vm206, 0.0, %v472
    %v496 = vsel %vm206, 0.0, %v474
    %v497 = vsel %vm206, 0.0, %v476
    %v498 = vsel %vm206, 0.0, %v478
    %v499 = vsel %vm206, 0.0, %v480
    %v500 = vsel %vm206, 0.0, %v482
    %v501 = vsel %vm206, 0.0, %v484
    %v502 = vsel %vm206, 0.0, %v486
    %v503 = vsel %vm445, %v495, 0.0
    %v504 = vsel %vm445, %v496, 0.0
    %v505 = vsel %vm445, %v497, 0.0
    %v506 = vsel %vm445, %v498, 0.0
    %v507 = vsel %vm445, %v499, 0.0
    %v508 = vsel %vm445, %v500, 0.0
    %v509 = vsel %vm445, %v501, 0.0
    %v510 = vsel %vm445, %v502, 0.0
    %v511 = vsel %vm454, %v503, 0.0
    %v512 = vsel %vm454, %v504, 0.0
    %v513 = vsel %vm454, %v505, 0.0
    %v514 = vsel %vm454, %v506, 0.0
    %v515 = vsel %vm454, %v507, 0.0
    %v516 = vsel %vm454, %v508, 0.0
    %v517 = vsel %vm454, %v509, 0.0
    %v518 = vsel %vm454, %v510, 0.0
    %519 = vrot.lane.b32.xlu0 %v429, 64
    %v520 = vpop.permute.xlu0 %519
    %521 = vrot.lane.b32.xlu0 %v430, 64
    %v522 = vpop.permute.xlu0 %521
    %523 = vrot.lane.b32.xlu0 %v431, 64
    %v524 = vpop.permute.xlu0 %523
    %525 = vrot.lane.b32.xlu0 %v432, 64
    %v526 = vpop.permute.xlu0 %525
    %527 = vrot.lane.b32.xlu0 %v433, 64
    %v528 = vpop.permute.xlu0 %527
    %529 = vrot.lane.b32.xlu0 %v434, 64
    %v530 = vpop.permute.xlu0 %529
    %531 = vrot.lane.b32.xlu0 %v435, 64
    %v532 = vpop.permute.xlu0 %531
    %533 = vrot.lane.b32.xlu0 %v436, 64
    %v534 = vpop.permute.xlu0 %533
    %v543 = vsel %vm445, 0.0, %v520
    %v544 = vsel %vm445, 0.0, %v522
    %v545 = vsel %vm445, 0.0, %v524
    %v546 = vsel %vm445, 0.0, %v526
    %v547 = vsel %vm445, 0.0, %v528
    %v548 = vsel %vm445, 0.0, %v530
    %v549 = vsel %vm445, 0.0, %v532
    %v550 = vsel %vm445, 0.0, %v534
    %v551 = vsel %vm454, %v543, 0.0
    %v552 = vsel %vm454, %v544, 0.0
    %v553 = vsel %vm454, %v545, 0.0
    %v554 = vsel %vm454, %v546, 0.0
    %v555 = vsel %vm454, %v547, 0.0
    %v556 = vsel %vm454, %v548, 0.0
    %v557 = vsel %vm454, %v549, 0.0
    %v558 = vsel %vm454, %v550, 0.0
    %559 = vrot.lane.b32.xlu0 %v429, 96
    %v560 = vpop.permute.xlu0 %559
    %561 = vrot.lane.b32.xlu0 %v430, 96
    %v562 = vpop.permute.xlu0 %561
    %563 = vrot.lane.b32.xlu0 %v431, 96
    %v564 = vpop.permute.xlu0 %563
    %565 = vrot.lane.b32.xlu0 %v432, 96
    %v566 = vpop.permute.xlu0 %565
    %567 = vrot.lane.b32.xlu0 %v433, 96
    %v568 = vpop.permute.xlu0 %567
    %569 = vrot.lane.b32.xlu0 %v434, 96
    %v570 = vpop.permute.xlu0 %569
    %571 = vrot.lane.b32.xlu0 %v435, 96
    %v572 = vpop.permute.xlu0 %571
    %573 = vrot.lane.b32.xlu0 %v436, 96
    %v574 = vpop.permute.xlu0 %573
    %v583 = vsel %vm454, 0.0, %v560
    %v584 = vsel %vm454, 0.0, %v562
    %v585 = vsel %vm454, 0.0, %v564
    %v586 = vsel %vm454, 0.0, %v566
    %v587 = vsel %vm454, 0.0, %v568
    %v588 = vsel %vm454, 0.0, %v570
    %v589 = vsel %vm454, 0.0, %v572
    %v590 = vsel %vm454, 0.0, %v574
    %591 = vmatprep.subr.mxu0 0.0
    %592 = vmatpush1.xpose.msra.mxu0 %v36
    %593 = vmatprep.subr.mxu0 0.0
    %594 = vmatpush1.xpose.msra.mxu0 %v35
    %595 = vmatprep.subr.mxu0 0.0
    %596 = vmatpush1.xpose.msra.mxu0 %v34
    %597 = vmatprep.subr.mxu0 0.0
    %598 = vmatpush1.xpose.msra.mxu0 %v33
    %599 = vmatprep.subr.mxu0 0.0
    %600 = vmatpush1.xpose.msra.mxu0 %v32
    %601 = vmatprep.subr.mxu0 0.0
    %602 = vmatpush1.xpose.msra.mxu0 %v31
    %603 = vmatprep.subr.mxu0 0.0
    %604 = vmatpush1.xpose.msra.mxu0 %v30
    %605 = vmatprep.subr.mxu0 0.0
    %606 = vmatpush1.xpose.msra.mxu0 %v29
    %607 = vmatprep.subr.mxu0 0.0
    %608 = vmatpush1.xpose.msra.mxu0 %v28
    %609 = vmatprep.subr.mxu0 0.0
    %610 = vmatpush1.xpose.msra.mxu0 %v27
    %611 = vmatprep.subr.mxu0 0.0
    %612 = vmatpush1.xpose.msra.mxu0 %v26
    %613 = vmatprep.subr.mxu0 0.0
    %614 = vmatpush1.xpose.msra.mxu0 %v25
    %615 = vmatprep.subr.mxu0 0.0
    %616 = vmatpush1.xpose.msra.mxu0 %v24
    %617 = vmatprep.subr.mxu0 0.0
    %618 = vmatpush1.xpose.msra.mxu0 %v23
    %619 = vmatprep.subr.mxu0 0.0
    %620 = vmatpush1.xpose.msra.mxu0 %v22
    %621 = vmatprep.subr.mxu0 0.0
    %622 = vmatpush1.xpose.msra.mxu0 %v21
    %623 = vmatprep.subr.mxu0 0.0
    %624 = vmatpush2.xpose.msra.mxu0 0.0
    %625 = vmatprep.subr.mxu0 0.0
    %626 = vmatpush2.xpose.msra.mxu0 0.0
    %627 = vmatprep.subr.mxu0 0.0
    %628 = vmatpush2.xpose.msra.mxu0 0.0
    %629 = vmatprep.subr.mxu0 0.0
    %630 = vmatpush2.xpose.msra.mxu0 0.0
    %631 = vmatprep.subr.mxu0 0.0
    %632 = vmatpush2.xpose.msra.mxu0 0.0
    %633 = vmatprep.subr.mxu0 0.0
    %634 = vmatpush2.xpose.msra.mxu0 0.0
    %635 = vmatprep.subr.mxu0 0.0
    %636 = vmatpush2.xpose.msra.mxu0 0.0
    %637 = vmatprep.subr.mxu0 0.0
    %638 = vmatpush2.xpose.msra.mxu0 0.0
    %639 = vmatprep.subr.mxu0 0.0
    %640 = vmatpush2.xpose.msra.mxu0 0.0
    %641 = vmatprep.subr.mxu0 0.0
    %642 = vmatpush2.xpose.msra.mxu0 0.0
    %643 = vmatprep.subr.mxu0 0.0
    %644 = vmatpush2.xpose.msra.mxu0 %v42
    %645 = vmatprep.subr.mxu0 0.0
    %646 = vmatpush2.xpose.msra.mxu0 %v41
    %647 = vmatprep.subr.mxu0 0.0
    %648 = vmatpush2.xpose.msra.mxu0 %v40
    %649 = vmatprep.subr.mxu0 0.0
    %650 = vmatpush2.xpose.msra.mxu0 %v39
    %651 = vmatprep.subr.mxu0 0.0
    %652 = vmatpush2.xpose.msra.mxu0 %v38
    %653 = vmatprep.subr.mxu0 0.0
    %654 = vmatpush2.xpose.msra.mxu0 %v37
    %655 = vmatprep.mubr.f32.mxu0 0.0
    %656 = vmatmul.mubr.f32.gmra.mxu0 %v455
    %v657 = vpop.f32.mrf.mxu0
    %v658 = vadd.f32 0.0, %v657
    %v659 = vpop.f32.mrf.mxu0
    %v660 = vadd.f32 0.0, %v659
    %661 = vmatprep.mubr.f32.mxu0 0.0
    %662 = vmatmul.mubr.f32.gmra.mxu0 %v511
    %v663 = vpop.f32.mrf.mxu0
    %v664 = vadd.f32 0.0, %v663
    %v665 = vpop.f32.mrf.mxu0
    %v666 = vadd.f32 0.0, %v665
    %667 = vmatprep.mubr.f32.mxu0 0.0
    %668 = vmatmul.mubr.f32.gmra.mxu0 %v551
    %v669 = vpop.f32.mrf.mxu0
    %v670 = vadd.f32 0.0, %v669
    %v671 = vpop.f32.mrf.mxu0
    %v672 = vadd.f32 0.0, %v671
    %673 = vmatprep.mubr.f32.mxu0 0.0
    %674 = vmatmul.mubr.f32.gmra.mxu0 %v583
    %v675 = vpop.f32.mrf.mxu0
    %v676 = vadd.f32 0.0, %v675
    %v677 = vpop.f32.mrf.mxu0
    %v678 = vadd.f32 0.0, %v677
    %679 = vdwg.mxu0
    %680 = vmatprep.subr.mxu0 0.0
    %681 = vmatpush1.xpose.msra.mxu0 %v58
    %682 = vmatprep.subr.mxu0 0.0
    %683 = vmatpush1.xpose.msra.mxu0 %v57
    %684 = vmatprep.subr.mxu0 0.0
    %685 = vmatpush1.xpose.msra.mxu0 %v56
    %686 = vmatprep.subr.mxu0 0.0
    %687 = vmatpush1.xpose.msra.mxu0 %v55
    %688 = vmatprep.subr.mxu0 0.0
    %689 = vmatpush1.xpose.msra.mxu0 %v54
    %690 = vmatprep.subr.mxu0 0.0
    %691 = vmatpush1.xpose.msra.mxu0 %v53
    %692 = vmatprep.subr.mxu0 0.0
    %693 = vmatpush1.xpose.msra.mxu0 %v52
    %694 = vmatprep.subr.mxu0 0.0
    %695 = vmatpush1.xpose.msra.mxu0 %v51
    %696 = vmatprep.subr.mxu0 0.0
    %697 = vmatpush1.xpose.msra.mxu0 %v50
    %698 = vmatprep.subr.mxu0 0.0
    %699 = vmatpush1.xpose.msra.mxu0 %v49
    %700 = vmatprep.subr.mxu0 0.0
    %701 = vmatpush1.xpose.msra.mxu0 %v48
    %702 = vmatprep.subr.mxu0 0.0
    %703 = vmatpush1.xpose.msra.mxu0 %v47
    %704 = vmatprep.subr.mxu0 0.0
    %705 = vmatpush1.xpose.msra.mxu0 %v46
    %706 = vmatprep.subr.mxu0 0.0
    %707 = vmatpush1.xpose.msra.mxu0 %v45
    %708 = vmatprep.subr.mxu0 0.0
    %709 = vmatpush1.xpose.msra.mxu0 %v44
    %710 = vmatprep.subr.mxu0 0.0
    %711 = vmatpush1.xpose.msra.mxu0 %v43
    %712 = vmatprep.subr.mxu0 0.0
    %713 = vmatpush2.xpose.msra.mxu0 0.0
    %714 = vmatprep.subr.mxu0 0.0
    %715 = vmatpush2.xpose.msra.mxu0 0.0
    %716 = vmatprep.subr.mxu0 0.0
    %717 = vmatpush2.xpose.msra.mxu0 0.0
    %718 = vmatprep.subr.mxu0 0.0
    %719 = vmatpush2.xpose.msra.mxu0 0.0
    %720 = vmatprep.subr.mxu0 0.0
    %721 = vmatpush2.xpose.msra.mxu0 0.0
    %722 = vmatprep.subr.mxu0 0.0
    %723 = vmatpush2.xpose.msra.mxu0 0.0
    %724 = vmatprep.subr.mxu0 0.0
    %725 = vmatpush2.xpose.msra.mxu0 0.0
    %726 = vmatprep.subr.mxu0 0.0
    %727 = vmatpush2.xpose.msra.mxu0 0.0
    %728 = vmatprep.subr.mxu0 0.0
    %729 = vmatpush2.xpose.msra.mxu0 0.0
    %730 = vmatprep.subr.mxu0 0.0
    %731 = vmatpush2.xpose.msra.mxu0 0.0
    %732 = vmatprep.subr.mxu0 0.0
    %733 = vmatpush2.xpose.msra.mxu0 %v64
    %734 = vmatprep.subr.mxu0 0.0
    %735 = vmatpush2.xpose.msra.mxu0 %v63
    %736 = vmatprep.subr.mxu0 0.0
    %737 = vmatpush2.xpose.msra.mxu0 %v62
    %738 = vmatprep.subr.mxu0 0.0
    %739 = vmatpush2.xpose.msra.mxu0 %v61
    %740 = vmatprep.subr.mxu0 0.0
    %741 = vmatpush2.xpose.msra.mxu0 %v60
    %742 = vmatprep.subr.mxu0 0.0
    %743 = vmatpush2.xpose.msra.mxu0 %v59
    %744 = vmatprep.mubr.f32.mxu0 0.0
    %745 = vmatmul.mubr.f32.gmra.mxu0 %v456
    %v746 = vpop.f32.mrf.mxu0
    %v747 = vadd.f32 0.0, %v746
    %v748 = vpop.f32.mrf.mxu0
    %v749 = vadd.f32 0.0, %v748
    %750 = vmatprep.mubr.f32.mxu0 0.0
    %751 = vmatmul.mubr.f32.gmra.mxu0 %v512
    %v752 = vpop.f32.mrf.mxu0
    %v753 = vadd.f32 0.0, %v752
    %v754 = vpop.f32.mrf.mxu0
    %v755 = vadd.f32 0.0, %v754
    %756 = vmatprep.mubr.f32.mxu0 0.0
    %757 = vmatmul.mubr.f32.gmra.mxu0 %v552
    %v758 = vpop.f32.mrf.mxu0
    %v759 = vadd.f32 0.0, %v758
    %v760 = vpop.f32.mrf.mxu0
    %v761 = vadd.f32 0.0, %v760
    %762 = vmatprep.mubr.f32.mxu0 0.0
    %763 = vmatmul.mubr.f32.gmra.mxu0 %v584
    %v764 = vpop.f32.mrf.mxu0
    %v765 = vadd.f32 0.0, %v764
    %v766 = vpop.f32.mrf.mxu0
    %v767 = vadd.f32 0.0, %v766
    %768 = vdwg.mxu0
    %769 = vmatprep.subr.mxu0 0.0
    %770 = vmatpush1.xpose.msra.mxu0 %v80
    %771 = vmatprep.subr.mxu0 0.0
    %772 = vmatpush1.xpose.msra.mxu0 %v79
    %773 = vmatprep.subr.mxu0 0.0
    %774 = vmatpush1.xpose.msra.mxu0 %v78
    %775 = vmatprep.subr.mxu0 0.0
    %776 = vmatpush1.xpose.msra.mxu0 %v77
    %777 = vmatprep.subr.mxu0 0.0
    %778 = vmatpush1.xpose.msra.mxu0 %v76
    %779 = vmatprep.subr.mxu0 0.0
    %780 = vmatpush1.xpose.msra.mxu0 %v75
    %781 = vmatprep.subr.mxu0 0.0
    %782 = vmatpush1.xpose.msra.mxu0 %v74
    %783 = vmatprep.subr.mxu0 0.0
    %784 = vmatpush1.xpose.msra.mxu0 %v73
    %785 = vmatprep.subr.mxu0 0.0
    %786 = vmatpush1.xpose.msra.mxu0 %v72
    %787 = vmatprep.subr.mxu0 0.0
    %788 = vmatpush1.xpose.msra.mxu0 %v71
    %789 = vmatprep.subr.mxu0 0.0
    %790 = vmatpush1.xpose.msra.mxu0 %v70
    %791 = vmatprep.subr.mxu0 0.0
    %792 = vmatpush1.xpose.msra.mxu0 %v69
    %793 = vmatprep.subr.mxu0 0.0
    %794 = vmatpush1.xpose.msra.mxu0 %v68
    %795 = vmatprep.subr.mxu0 0.0
    %796 = vmatpush1.xpose.msra.mxu0 %v67
    %797 = vmatprep.subr.mxu0 0.0
    %798 = vmatpush1.xpose.msra.mxu0 %v66
    %799 = vmatprep.subr.mxu0 0.0
    %800 = vmatpush1.xpose.msra.mxu0 %v65
    %801 = vmatprep.subr.mxu0 0.0
    %802 = vmatpush2.xpose.msra.mxu0 0.0
    %803 = vmatprep.subr.mxu0 0.0
    %804 = vmatpush2.xpose.msra.mxu0 0.0
    %805 = vmatprep.subr.mxu0 0.0
    %806 = vmatpush2.xpose.msra.mxu0 0.0
    %807 = vmatprep.subr.mxu0 0.0
    %808 = vmatpush2.xpose.msra.mxu0 0.0
    %809 = vmatprep.subr.mxu0 0.0
    %810 = vmatpush2.xpose.msra.mxu0 0.0
    %811 = vmatprep.subr.mxu0 0.0
    %812 = vmatpush2.xpose.msra.mxu0 0.0
    %813 = vmatprep.subr.mxu0 0.0
    %814 = vmatpush2.xpose.msra.mxu0 0.0
    %815 = vmatprep.subr.mxu0 0.0
    %816 = vmatpush2.xpose.msra.mxu0 0.0
    %817 = vmatprep.subr.mxu0 0.0
    %818 = vmatpush2.xpose.msra.mxu0 0.0
    %819 = vmatprep.subr.mxu0 0.0
    %820 = vmatpush2.xpose.msra.mxu0 0.0
    %821 = vmatprep.subr.mxu0 0.0
    %822 = vmatpush2.xpose.msra.mxu0 %v86
    %823 = vmatprep.subr.mxu0 0.0
    %824 = vmatpush2.xpose.msra.mxu0 %v85
    %825 = vmatprep.subr.mxu0 0.0
    %826 = vmatpush2.xpose.msra.mxu0 %v84
    %827 = vmatprep.subr.mxu0 0.0
    %828 = vmatpush2.xpose.msra.mxu0 %v83
    %829 = vmatprep.subr.mxu0 0.0
    %830 = vmatpush2.xpose.msra.mxu0 %v82
    %831 = vmatprep.subr.mxu0 0.0
    %832 = vmatpush2.xpose.msra.mxu0 %v81
    %833 = vmatprep.mubr.f32.mxu0 0.0
    %834 = vmatmul.mubr.f32.gmra.mxu0 %v457
    %v835 = vpop.f32.mrf.mxu0
    %v836 = vadd.f32 0.0, %v835
    %v837 = vpop.f32.mrf.mxu0
    %v838 = vadd.f32 0.0, %v837
    %839 = vmatprep.mubr.f32.mxu0 0.0
    %840 = vmatmul.mubr.f32.gmra.mxu0 %v513
    %v841 = vpop.f32.mrf.mxu0
    %v842 = vadd.f32 0.0, %v841
    %v843 = vpop.f32.mrf.mxu0
    %v844 = vadd.f32 0.0, %v843
    %845 = vmatprep.mubr.f32.mxu0 0.0
    %846 = vmatmul.mubr.f32.gmra.mxu0 %v553
    %v847 = vpop.f32.mrf.mxu0
    %v848 = vadd.f32 0.0, %v847
    %v849 = vpop.f32.mrf.mxu0
    %v850 = vadd.f32 0.0, %v849
    %851 = vmatprep.mubr.f32.mxu0 0.0
    %852 = vmatmul.mubr.f32.gmra.mxu0 %v585
    %v853 = vpop.f32.mrf.mxu0
    %v854 = vadd.f32 0.0, %v853
    %v855 = vpop.f32.mrf.mxu0
    %v856 = vadd.f32 0.0, %v855
    %857 = vdwg.mxu0
    %858 = vmatprep.subr.mxu0 0.0
    %859 = vmatpush1.xpose.msra.mxu0 %v102
    %860 = vmatprep.subr.mxu0 0.0
    %861 = vmatpush1.xpose.msra.mxu0 %v101
    %862 = vmatprep.subr.mxu0 0.0
    %863 = vmatpush1.xpose.msra.mxu0 %v100
    %864 = vmatprep.subr.mxu0 0.0
    %865 = vmatpush1.xpose.msra.mxu0 %v99
    %866 = vmatprep.subr.mxu0 0.0
    %867 = vmatpush1.xpose.msra.mxu0 %v98
    %868 = vmatprep.subr.mxu0 0.0
    %869 = vmatpush1.xpose.msra.mxu0 %v97
    %870 = vmatprep.subr.mxu0 0.0
    %871 = vmatpush1.xpose.msra.mxu0 %v96
    %872 = vmatprep.subr.mxu0 0.0
    %873 = vmatpush1.xpose.msra.mxu0 %v95
    %874 = vmatprep.subr.mxu0 0.0
    %875 = vmatpush1.xpose.msra.mxu0 %v94
    %876 = vmatprep.subr.mxu0 0.0
    %877 = vmatpush1.xpose.msra.mxu0 %v93
    %878 = vmatprep.subr.mxu0 0.0
    %879 = vmatpush1.xpose.msra.mxu0 %v92
    %880 = vmatprep.subr.mxu0 0.0
    %881 = vmatpush1.xpose.msra.mxu0 %v91
    %882 = vmatprep.subr.mxu0 0.0
    %883 = vmatpush1.xpose.msra.mxu0 %v90
    %884 = vmatprep.subr.mxu0 0.0
    %885 = vmatpush1.xpose.msra.mxu0 %v89
    %886 = vmatprep.subr.mxu0 0.0
    %887 = vmatpush1.xpose.msra.mxu0 %v88
    %888 = vmatprep.subr.mxu0 0.0
    %889 = vmatpush1.xpose.msra.mxu0 %v87
    %890 = vmatprep.subr.mxu0 0.0
    %891 = vmatpush2.xpose.msra.mxu0 0.0
    %892 = vmatprep.subr.mxu0 0.0
    %893 = vmatpush2.xpose.msra.mxu0 0.0
    %894 = vmatprep.subr.mxu0 0.0
    %895 = vmatpush2.xpose.msra.mxu0 0.0
    %896 = vmatprep.subr.mxu0 0.0
    %897 = vmatpush2.xpose.msra.mxu0 0.0
    %898 = vmatprep.subr.mxu0 0.0
    %899 = vmatpush2.xpose.msra.mxu0 0.0
    %900 = vmatprep.subr.mxu0 0.0
    %901 = vmatpush2.xpose.msra.mxu0 0.0
    %902 = vmatprep.subr.mxu0 0.0
    %903 = vmatpush2.xpose.msra.mxu0 0.0
    %904 = vmatprep.subr.mxu0 0.0
    %905 = vmatpush2.xpose.msra.mxu0 0.0
    %906 = vmatprep.subr.mxu0 0.0
    %907 = vmatpush2.xpose.msra.mxu0 0.0
    %908 = vmatprep.subr.mxu0 0.0
    %909 = vmatpush2.xpose.msra.mxu0 0.0
    %910 = vmatprep.subr.mxu0 0.0
    %911 = vmatpush2.xpose.msra.mxu0 %v108
    %912 = vmatprep.subr.mxu0 0.0
    %913 = vmatpush2.xpose.msra.mxu0 %v107
    %914 = vmatprep.subr.mxu0 0.0
    %915 = vmatpush2.xpose.msra.mxu0 %v106
    %916 = vmatprep.subr.mxu0 0.0
    %917 = vmatpush2.xpose.msra.mxu0 %v105
    %918 = vmatprep.subr.mxu0 0.0
    %919 = vmatpush2.xpose.msra.mxu0 %v104
    %920 = vmatprep.subr.mxu0 0.0
    %921 = vmatpush2.xpose.msra.mxu0 %v103
    %922 = vmatprep.mubr.f32.mxu0 0.0
    %923 = vmatmul.mubr.f32.gmra.mxu0 %v458
    %v924 = vpop.f32.mrf.mxu0
    %v925 = vadd.f32 0.0, %v924
    %v926 = vpop.f32.mrf.mxu0
    %v927 = vadd.f32 0.0, %v926
    %928 = vmatprep.mubr.f32.mxu0 0.0
    %929 = vmatmul.mubr.f32.gmra.mxu0 %v514
    %v930 = vpop.f32.mrf.mxu0
    %v931 = vadd.f32 0.0, %v930
    %v932 = vpop.f32.mrf.mxu0
    %v933 = vadd.f32 0.0, %v932
    %934 = vmatprep.mubr.f32.mxu0 0.0
    %935 = vmatmul.mubr.f32.gmra.mxu0 %v554
    %v936 = vpop.f32.mrf.mxu0
    %v937 = vadd.f32 0.0, %v936
    %v938 = vpop.f32.mrf.mxu0
    %v939 = vadd.f32 0.0, %v938
    %940 = vmatprep.mubr.f32.mxu0 0.0
    %941 = vmatmul.mubr.f32.gmra.mxu0 %v586
    %v942 = vpop.f32.mrf.mxu0
    %v943 = vadd.f32 0.0, %v942
    %v944 = vpop.f32.mrf.mxu0
    %v945 = vadd.f32 0.0, %v944
    %946 = vdwg.mxu0
    %947 = vmatprep.subr.mxu0 0.0
    %948 = vmatpush1.xpose.msra.mxu0 %v124
    %949 = vmatprep.subr.mxu0 0.0
    %950 = vmatpush1.xpose.msra.mxu0 %v123
    %951 = vmatprep.subr.mxu0 0.0
    %952 = vmatpush1.xpose.msra.mxu0 %v122
    %953 = vmatprep.subr.mxu0 0.0
    %954 = vmatpush1.xpose.msra.mxu0 %v121
    %955 = vmatprep.subr.mxu0 0.0
    %956 = vmatpush1.xpose.msra.mxu0 %v120
    %957 = vmatprep.subr.mxu0 0.0
    %958 = vmatpush1.xpose.msra.mxu0 %v119
    %959 = vmatprep.subr.mxu0 0.0
    %960 = vmatpush1.xpose.msra.mxu0 %v118
    %961 = vmatprep.subr.mxu0 0.0
    %962 = vmatpush1.xpose.msra.mxu0 %v117
    %963 = vmatprep.subr.mxu0 0.0
    %964 = vmatpush1.xpose.msra.mxu0 %v116
    %965 = vmatprep.subr.mxu0 0.0
    %966 = vmatpush1.xpose.msra.mxu0 %v115
    %967 = vmatprep.subr.mxu0 0.0
    %968 = vmatpush1.xpose.msra.mxu0 %v114
    %969 = vmatprep.subr.mxu0 0.0
    %970 = vmatpush1.xpose.msra.mxu0 %v113
    %971 = vmatprep.subr.mxu0 0.0
    %972 = vmatpush1.xpose.msra.mxu0 %v112
    %973 = vmatprep.subr.mxu0 0.0
    %974 = vmatpush1.xpose.msra.mxu0 %v111
    %975 = vmatprep.subr.mxu0 0.0
    %976 = vmatpush1.xpose.msra.mxu0 %v110
    %977 = vmatprep.subr.mxu0 0.0
    %978 = vmatpush1.xpose.msra.mxu0 %v109
    %979 = vmatprep.subr.mxu0 0.0
    %980 = vmatpush2.xpose.msra.mxu0 0.0
    %981 = vmatprep.subr.mxu0 0.0
    %982 = vmatpush2.xpose.msra.mxu0 0.0
    %983 = vmatprep.subr.mxu0 0.0
    %984 = vmatpush2.xpose.msra.mxu0 0.0
    %985 = vmatprep.subr.mxu0 0.0
    %986 = vmatpush2.xpose.msra.mxu0 0.0
    %987 = vmatprep.subr.mxu0 0.0
    %988 = vmatpush2.xpose.msra.mxu0 0.0
    %989 = vmatprep.subr.mxu0 0.0
    %990 = vmatpush2.xpose.msra.mxu0 0.0
    %991 = vmatprep.subr.mxu0 0.0
    %992 = vmatpush2.xpose.msra.mxu0 0.0
    %993 = vmatprep.subr.mxu0 0.0
    %994 = vmatpush2.xpose.msra.mxu0 0.0
    %995 = vmatprep.subr.mxu0 0.0
    %996 = vmatpush2.xpose.msra.mxu0 0.0
    %997 = vmatprep.subr.mxu0 0.0
    %998 = vmatpush2.xpose.msra.mxu0 0.0
    %999 = vmatprep.subr.mxu0 0.0
    %1000 = vmatpush2.xpose.msra.mxu0 %v130
    %1001 = vmatprep.subr.mxu0 0.0
    %1002 = vmatpush2.xpose.msra.mxu0 %v129
    %1003 = vmatprep.subr.mxu0 0.0
    %1004 = vmatpush2.xpose.msra.mxu0 %v128
    %1005 = vmatprep.subr.mxu0 0.0
    %1006 = vmatpush2.xpose.msra.mxu0 %v127
    %1007 = vmatprep.subr.mxu0 0.0
    %1008 = vmatpush2.xpose.msra.mxu0 %v126
    %1009 = vmatprep.subr.mxu0 0.0
    %1010 = vmatpush2.xpose.msra.mxu0 %v125
    %1011 = vmatprep.mubr.f32.mxu0 0.0
    %1012 = vmatmul.mubr.f32.gmra.mxu0 %v459
    %v1013 = vpop.f32.mrf.mxu0
    %v1014 = vadd.f32 0.0, %v1013
    %v1015 = vpop.f32.mrf.mxu0
    %v1016 = vadd.f32 0.0, %v1015
    %1017 = vmatprep.mubr.f32.mxu0 0.0
    %1018 = vmatmul.mubr.f32.gmra.mxu0 %v515
    %v1019 = vpop.f32.mrf.mxu0
    %v1020 = vadd.f32 0.0, %v1019
    %v1021 = vpop.f32.mrf.mxu0
    %v1022 = vadd.f32 0.0, %v1021
    %1023 = vmatprep.mubr.f32.mxu0 0.0
    %1024 = vmatmul.mubr.f32.gmra.mxu0 %v555
    %v1025 = vpop.f32.mrf.mxu0
    %v1026 = vadd.f32 0.0, %v1025
    %v1027 = vpop.f32.mrf.mxu0
    %v1028 = vadd.f32 0.0, %v1027
    %1029 = vmatprep.mubr.f32.mxu0 0.0
    %1030 = vmatmul.mubr.f32.gmra.mxu0 %v587
    %v1031 = vpop.f32.mrf.mxu0
    %v1032 = vadd.f32 0.0, %v1031
    %v1033 = vpop.f32.mrf.mxu0
    %v1034 = vadd.f32 0.0, %v1033
    %1035 = vdwg.mxu0
    %1036 = vmatprep.subr.mxu0 0.0
    %1037 = vmatpush1.xpose.msra.mxu0 %v146
    %1038 = vmatprep.subr.mxu0 0.0
    %1039 = vmatpush1.xpose.msra.mxu0 %v145
    %1040 = vmatprep.subr.mxu0 0.0
    %1041 = vmatpush1.xpose.msra.mxu0 %v144
    %1042 = vmatprep.subr.mxu0 0.0
    %1043 = vmatpush1.xpose.msra.mxu0 %v143
    %1044 = vmatprep.subr.mxu0 0.0
    %1045 = vmatpush1.xpose.msra.mxu0 %v142
    %1046 = vmatprep.subr.mxu0 0.0
    %1047 = vmatpush1.xpose.msra.mxu0 %v141
    %1048 = vmatprep.subr.mxu0 0.0
    %1049 = vmatpush1.xpose.msra.mxu0 %v140
    %1050 = vmatprep.subr.mxu0 0.0
    %1051 = vmatpush1.xpose.msra.mxu0 %v139
    %1052 = vmatprep.subr.mxu0 0.0
    %1053 = vmatpush1.xpose.msra.mxu0 %v138
    %1054 = vmatprep.subr.mxu0 0.0
    %1055 = vmatpush1.xpose.msra.mxu0 %v137
    %1056 = vmatprep.subr.mxu0 0.0
    %1057 = vmatpush1.xpose.msra.mxu0 %v136
    %1058 = vmatprep.subr.mxu0 0.0
    %1059 = vmatpush1.xpose.msra.mxu0 %v135
    %1060 = vmatprep.subr.mxu0 0.0
    %1061 = vmatpush1.xpose.msra.mxu0 %v134
    %1062 = vmatprep.subr.mxu0 0.0
    %1063 = vmatpush1.xpose.msra.mxu0 %v133
    %1064 = vmatprep.subr.mxu0 0.0
    %1065 = vmatpush1.xpose.msra.mxu0 %v132
    %1066 = vmatprep.subr.mxu0 0.0
    %1067 = vmatpush1.xpose.msra.mxu0 %v131
    %1068 = vmatprep.subr.mxu0 0.0
    %1069 = vmatpush2.xpose.msra.mxu0 0.0
    %1070 = vmatprep.subr.mxu0 0.0
    %1071 = vmatpush2.xpose.msra.mxu0 0.0
    %1072 = vmatprep.subr.mxu0 0.0
    %1073 = vmatpush2.xpose.msra.mxu0 0.0
    %1074 = vmatprep.subr.mxu0 0.0
    %1075 = vmatpush2.xpose.msra.mxu0 0.0
    %1076 = vmatprep.subr.mxu0 0.0
    %1077 = vmatpush2.xpose.msra.mxu0 0.0
    %1078 = vmatprep.subr.mxu0 0.0
    %1079 = vmatpush2.xpose.msra.mxu0 0.0
    %1080 = vmatprep.subr.mxu0 0.0
    %1081 = vmatpush2.xpose.msra.mxu0 0.0
    %1082 = vmatprep.subr.mxu0 0.0
    %1083 = vmatpush2.xpose.msra.mxu0 0.0
    %1084 = vmatprep.subr.mxu0 0.0
    %1085 = vmatpush2.xpose.msra.mxu0 0.0
    %1086 = vmatprep.subr.mxu0 0.0
    %1087 = vmatpush2.xpose.msra.mxu0 0.0
    %1088 = vmatprep.subr.mxu0 0.0
    %1089 = vmatpush2.xpose.msra.mxu0 %v152
    %1090 = vmatprep.subr.mxu0 0.0
    %1091 = vmatpush2.xpose.msra.mxu0 %v151
    %1092 = vmatprep.subr.mxu0 0.0
    %1093 = vmatpush2.xpose.msra.mxu0 %v150
    %1094 = vmatprep.subr.mxu0 0.0
    %1095 = vmatpush2.xpose.msra.mxu0 %v149
    %1096 = vmatprep.subr.mxu0 0.0
    %1097 = vmatpush2.xpose.msra.mxu0 %v148
    %1098 = vmatprep.subr.mxu0 0.0
    %1099 = vmatpush2.xpose.msra.mxu0 %v147
    %1100 = vmatprep.mubr.f32.mxu0 0.0
    %1101 = vmatmul.mubr.f32.gmra.mxu0 %v460
    %v1102 = vpop.f32.mrf.mxu0
    %v1103 = vadd.f32 0.0, %v1102
    %v1104 = vpop.f32.mrf.mxu0
    %v1105 = vadd.f32 0.0, %v1104
    %1106 = vmatprep.mubr.f32.mxu0 0.0
    %1107 = vmatmul.mubr.f32.gmra.mxu0 %v516
    %v1108 = vpop.f32.mrf.mxu0
    %v1109 = vadd.f32 0.0, %v1108
    %v1110 = vpop.f32.mrf.mxu0
    %v1111 = vadd.f32 0.0, %v1110
    %1112 = vmatprep.mubr.f32.mxu0 0.0
    %1113 = vmatmul.mubr.f32.gmra.mxu0 %v556
    %v1114 = vpop.f32.mrf.mxu0
    %v1115 = vadd.f32 0.0, %v1114
    %v1116 = vpop.f32.mrf.mxu0
    %v1117 = vadd.f32 0.0, %v1116
    %1118 = vmatprep.mubr.f32.mxu0 0.0
    %1119 = vmatmul.mubr.f32.gmra.mxu0 %v588
    %v1120 = vpop.f32.mrf.mxu0
    %v1121 = vadd.f32 0.0, %v1120
    %v1122 = vpop.f32.mrf.mxu0
    %v1123 = vadd.f32 0.0, %v1122
    %1124 = vdwg.mxu0
    %1125 = vmatprep.subr.mxu0 0.0
    %1126 = vmatpush1.xpose.msra.mxu0 %v168
    %1127 = vmatprep.subr.mxu0 0.0
    %1128 = vmatpush1.xpose.msra.mxu0 %v167
    %1129 = vmatprep.subr.mxu0 0.0
    %1130 = vmatpush1.xpose.msra.mxu0 %v166
    %1131 = vmatprep.subr.mxu0 0.0
    %1132 = vmatpush1.xpose.msra.mxu0 %v165
    %1133 = vmatprep.subr.mxu0 0.0
    %1134 = vmatpush1.xpose.msra.mxu0 %v164
    %1135 = vmatprep.subr.mxu0 0.0
    %1136 = vmatpush1.xpose.msra.mxu0 %v163
    %1137 = vmatprep.subr.mxu0 0.0
    %1138 = vmatpush1.xpose.msra.mxu0 %v162
    %1139 = vmatprep.subr.mxu0 0.0
    %1140 = vmatpush1.xpose.msra.mxu0 %v161
    %1141 = vmatprep.subr.mxu0 0.0
    %1142 = vmatpush1.xpose.msra.mxu0 %v160
    %1143 = vmatprep.subr.mxu0 0.0
    %1144 = vmatpush1.xpose.msra.mxu0 %v159
    %1145 = vmatprep.subr.mxu0 0.0
    %1146 = vmatpush1.xpose.msra.mxu0 %v158
    %1147 = vmatprep.subr.mxu0 0.0
    %1148 = vmatpush1.xpose.msra.mxu0 %v157
    %1149 = vmatprep.subr.mxu0 0.0
    %1150 = vmatpush1.xpose.msra.mxu0 %v156
    %1151 = vmatprep.subr.mxu0 0.0
    %1152 = vmatpush1.xpose.msra.mxu0 %v155
    %1153 = vmatprep.subr.mxu0 0.0
    %1154 = vmatpush1.xpose.msra.mxu0 %v154
    %1155 = vmatprep.subr.mxu0 0.0
    %1156 = vmatpush1.xpose.msra.mxu0 %v153
    %1157 = vmatprep.subr.mxu0 0.0
    %1158 = vmatpush2.xpose.msra.mxu0 0.0
    %1159 = vmatprep.subr.mxu0 0.0
    %1160 = vmatpush2.xpose.msra.mxu0 0.0
    %1161 = vmatprep.subr.mxu0 0.0
    %1162 = vmatpush2.xpose.msra.mxu0 0.0
    %1163 = vmatprep.subr.mxu0 0.0
    %1164 = vmatpush2.xpose.msra.mxu0 0.0
    %1165 = vmatprep.subr.mxu0 0.0
    %1166 = vmatpush2.xpose.msra.mxu0 0.0
    %1167 = vmatprep.subr.mxu0 0.0
    %1168 = vmatpush2.xpose.msra.mxu0 0.0
    %1169 = vmatprep.subr.mxu0 0.0
    %1170 = vmatpush2.xpose.msra.mxu0 0.0
    %1171 = vmatprep.subr.mxu0 0.0
    %1172 = vmatpush2.xpose.msra.mxu0 0.0
    %1173 = vmatprep.subr.mxu0 0.0
    %1174 = vmatpush2.xpose.msra.mxu0 0.0
    %1175 = vmatprep.subr.mxu0 0.0
    %1176 = vmatpush2.xpose.msra.mxu0 0.0
    %1177 = vmatprep.subr.mxu0 0.0
    %1178 = vmatpush2.xpose.msra.mxu0 %v174
    %1179 = vmatprep.subr.mxu0 0.0
    %1180 = vmatpush2.xpose.msra.mxu0 %v173
    %1181 = vmatprep.subr.mxu0 0.0
    %1182 = vmatpush2.xpose.msra.mxu0 %v172
    %1183 = vmatprep.subr.mxu0 0.0
    %1184 = vmatpush2.xpose.msra.mxu0 %v171
    %1185 = vmatprep.subr.mxu0 0.0
    %1186 = vmatpush2.xpose.msra.mxu0 %v170
    %1187 = vmatprep.subr.mxu0 0.0
    %1188 = vmatpush2.xpose.msra.mxu0 %v169
    %1189 = vmatprep.mubr.f32.mxu0 0.0
    %1190 = vmatmul.mubr.f32.gmra.mxu0 %v461
    %v1191 = vpop.f32.mrf.mxu0
    %v1192 = vadd.f32 0.0, %v1191
    %v1193 = vpop.f32.mrf.mxu0
    %v1194 = vadd.f32 0.0, %v1193
    %1195 = vmatprep.mubr.f32.mxu0 0.0
    %1196 = vmatmul.mubr.f32.gmra.mxu0 %v517
    %v1197 = vpop.f32.mrf.mxu0
    %v1198 = vadd.f32 0.0, %v1197
    %v1199 = vpop.f32.mrf.mxu0
    %v1200 = vadd.f32 0.0, %v1199
    %1201 = vmatprep.mubr.f32.mxu0 0.0
    %1202 = vmatmul.mubr.f32.gmra.mxu0 %v557
    %v1203 = vpop.f32.mrf.mxu0
    %v1204 = vadd.f32 0.0, %v1203
    %v1205 = vpop.f32.mrf.mxu0
    %v1206 = vadd.f32 0.0, %v1205
    %1207 = vmatprep.mubr.f32.mxu0 0.0
    %1208 = vmatmul.mubr.f32.gmra.mxu0 %v589
    %v1209 = vpop.f32.mrf.mxu0
    %v1210 = vadd.f32 0.0, %v1209
    %v1211 = vpop.f32.mrf.mxu0
    %v1212 = vadd.f32 0.0, %v1211
    %1213 = vdwg.mxu0
    %1214 = vmatprep.subr.mxu0 0.0
    %1215 = vmatpush1.xpose.msra.mxu0 %v190
    %1216 = vmatprep.subr.mxu0 0.0
    %1217 = vmatpush1.xpose.msra.mxu0 %v189
    %1218 = vmatprep.subr.mxu0 0.0
    %1219 = vmatpush1.xpose.msra.mxu0 %v188
    %1220 = vmatprep.subr.mxu0 0.0
    %1221 = vmatpush1.xpose.msra.mxu0 %v187
    %1222 = vmatprep.subr.mxu0 0.0
    %1223 = vmatpush1.xpose.msra.mxu0 %v186
    %1224 = vmatprep.subr.mxu0 0.0
    %1225 = vmatpush1.xpose.msra.mxu0 %v185
    %1226 = vmatprep.subr.mxu0 0.0
    %1227 = vmatpush1.xpose.msra.mxu0 %v184
    %1228 = vmatprep.subr.mxu0 0.0
    %1229 = vmatpush1.xpose.msra.mxu0 %v183
    %1230 = vmatprep.subr.mxu0 0.0
    %1231 = vmatpush1.xpose.msra.mxu0 %v182
    %1232 = vmatprep.subr.mxu0 0.0
    %1233 = vmatpush1.xpose.msra.mxu0 %v181
    %1234 = vmatprep.subr.mxu0 0.0
    %1235 = vmatpush1.xpose.msra.mxu0 %v180
    %1236 = vmatprep.subr.mxu0 0.0
    %1237 = vmatpush1.xpose.msra.mxu0 %v179
    %1238 = vmatprep.subr.mxu0 0.0
    %1239 = vmatpush1.xpose.msra.mxu0 %v178
    %1240 = vmatprep.subr.mxu0 0.0
    %1241 = vmatpush1.xpose.msra.mxu0 %v177
    %1242 = vmatprep.subr.mxu0 0.0
    %1243 = vmatpush1.xpose.msra.mxu0 %v176
    %1244 = vmatprep.subr.mxu0 0.0
    %1245 = vmatpush1.xpose.msra.mxu0 %v175
    %1246 = vmatprep.subr.mxu0 0.0
    %1247 = vmatpush2.xpose.msra.mxu0 0.0
    %1248 = vmatprep.subr.mxu0 0.0
    %1249 = vmatpush2.xpose.msra.mxu0 0.0
    %1250 = vmatprep.subr.mxu0 0.0
    %1251 = vmatpush2.xpose.msra.mxu0 0.0
    %1252 = vmatprep.subr.mxu0 0.0
    %1253 = vmatpush2.xpose.msra.mxu0 0.0
    %1254 = vmatprep.subr.mxu0 0.0
    %1255 = vmatpush2.xpose.msra.mxu0 0.0
    %1256 = vmatprep.subr.mxu0 0.0
    %1257 = vmatpush2.xpose.msra.mxu0 0.0
    %1258 = vmatprep.subr.mxu0 0.0
    %1259 = vmatpush2.xpose.msra.mxu0 0.0
    %1260 = vmatprep.subr.mxu0 0.0
    %1261 = vmatpush2.xpose.msra.mxu0 0.0
    %1262 = vmatprep.subr.mxu0 0.0
    %1263 = vmatpush2.xpose.msra.mxu0 0.0
    %1264 = vmatprep.subr.mxu0 0.0
    %1265 = vmatpush2.xpose.msra.mxu0 0.0
    %1266 = vmatprep.subr.mxu0 0.0
    %1267 = vmatpush2.xpose.msra.mxu0 %v196
    %1268 = vmatprep.subr.mxu0 0.0
    %1269 = vmatpush2.xpose.msra.mxu0 %v195
    %1270 = vmatprep.subr.mxu0 0.0
    %1271 = vmatpush2.xpose.msra.mxu0 %v194
    %1272 = vmatprep.subr.mxu0 0.0
    %1273 = vmatpush2.xpose.msra.mxu0 %v193
    %1274 = vmatprep.subr.mxu0 0.0
    %1275 = vmatpush2.xpose.msra.mxu0 %v192
    %1276 = vmatprep.subr.mxu0 0.0
    %1277 = vmatpush2.xpose.msra.mxu0 %v191
    %1278 = vmatprep.mubr.f32.mxu0 0.0
    %1279 = vmatmul.mubr.f32.gmra.mxu0 %v462
    %v1280 = vpop.f32.mrf.mxu0
    %v1281 = vadd.f32 0.0, %v1280
    %v1282 = vpop.f32.mrf.mxu0
    %v1283 = vadd.f32 0.0, %v1282
    %1284 = vmatprep.mubr.f32.mxu0 0.0
    %1285 = vmatmul.mubr.f32.gmra.mxu0 %v518
    %v1286 = vpop.f32.mrf.mxu0
    %v1287 = vadd.f32 0.0, %v1286
    %v1288 = vpop.f32.mrf.mxu0
    %v1289 = vadd.f32 0.0, %v1288
    %1290 = vmatprep.mubr.f32.mxu0 0.0
    %1291 = vmatmul.mubr.f32.gmra.mxu0 %v558
    %v1292 = vpop.f32.mrf.mxu0
    %v1293 = vadd.f32 0.0, %v1292
    %v1294 = vpop.f32.mrf.mxu0
    %v1295 = vadd.f32 0.0, %v1294
    %1296 = vmatprep.mubr.f32.mxu0 0.0
    %1297 = vmatmul.mubr.f32.gmra.mxu0 %v590
    %v1298 = vpop.f32.mrf.mxu0
    %v1299 = vadd.f32 0.0, %v1298
    %v1300 = vpop.f32.mrf.mxu0
    %v1301 = vadd.f32 0.0, %v1300
    %1302 = vdwg.mxu0
    %vm1303 = vcmask 384000
    %v1304 = vsel %vm1303, %v660, -inf
    %v1305 = vmax.f32 %v658, %v1304
    %1306 = vmax.xlane.f32.xlu0 %v1305
    %v1307 = vpop.xlane.xlu0 %1306
    %v1308 = vsel %vm1303, %v666, -inf
    %v1309 = vmax.f32 %v664, %v1308
    %1310 = vmax.xlane.f32.xlu0 %v1309
    %v1311 = vpop.xlane.xlu0 %1310
    %v1312 = vsel %vm1303, %v672, -inf
    %v1313 = vmax.f32 %v670, %v1312
    %1314 = vmax.xlane.f32.xlu0 %v1313
    %v1315 = vpop.xlane.xlu0 %1314
    %v1316 = vsel %vm1303, %v678, -inf
    %v1317 = vmax.f32 %v676, %v1316
    %1318 = vmax.xlane.f32.xlu0 %v1317
    %v1319 = vpop.xlane.xlu0 %1318
    %v1320 = vsel %vm1303, %v749, -inf
    %v1321 = vmax.f32 %v747, %v1320
    %1322 = vmax.xlane.f32.xlu0 %v1321
    %v1323 = vpop.xlane.xlu0 %1322
    %v1324 = vsel %vm1303, %v755, -inf
    %v1325 = vmax.f32 %v753, %v1324
    %1326 = vmax.xlane.f32.xlu0 %v1325
    %v1327 = vpop.xlane.xlu0 %1326
    %v1328 = vsel %vm1303, %v761, -inf
    %v1329 = vmax.f32 %v759, %v1328
    %1330 = vmax.xlane.f32.xlu0 %v1329
    %v1331 = vpop.xlane.xlu0 %1330
    %v1332 = vsel %vm1303, %v767, -inf
    %v1333 = vmax.f32 %v765, %v1332
    %1334 = vmax.xlane.f32.xlu0 %v1333
    %v1335 = vpop.xlane.xlu0 %1334
    %v1336 = vsel %vm1303, %v838, -inf
    %v1337 = vmax.f32 %v836, %v1336
    %1338 = vmax.xlane.f32.xlu0 %v1337
    %v1339 = vpop.xlane.xlu0 %1338
    %v1340 = vsel %vm1303, %v844, -inf
    %v1341 = vmax.f32 %v842, %v1340
    %1342 = vmax.xlane.f32.xlu0 %v1341
    %v1343 = vpop.xlane.xlu0 %1342
    %v1344 = vsel %vm1303, %v850, -inf
    %v1345 = vmax.f32 %v848, %v1344
    %1346 = vmax.xlane.f32.xlu0 %v1345
    %v1347 = vpop.xlane.xlu0 %1346
    %v1348 = vsel %vm1303, %v856, -inf
    %v1349 = vmax.f32 %v854, %v1348
    %1350 = vmax.xlane.f32.xlu0 %v1349
    %v1351 = vpop.xlane.xlu0 %1350
    %v1352 = vsel %vm1303, %v927, -inf
    %v1353 = vmax.f32 %v925, %v1352
    %1354 = vmax.xlane.f32.xlu0 %v1353
    %v1355 = vpop.xlane.xlu0 %1354
    %v1356 = vsel %vm1303, %v933, -inf
    %v1357 = vmax.f32 %v931, %v1356
    %1358 = vmax.xlane.f32.xlu0 %v1357
    %v1359 = vpop.xlane.xlu0 %1358
    %v1360 = vsel %vm1303, %v939, -inf
    %v1361 = vmax.f32 %v937, %v1360
    %1362 = vmax.xlane.f32.xlu0 %v1361
    %v1363 = vpop.xlane.xlu0 %1362
    %v1364 = vsel %vm1303, %v945, -inf
    %v1365 = vmax.f32 %v943, %v1364
    %1366 = vmax.xlane.f32.xlu0 %v1365
    %v1367 = vpop.xlane.xlu0 %1366
    %v1368 = vsel %vm1303, %v1016, -inf
    %v1369 = vmax.f32 %v1014, %v1368
    %1370 = vmax.xlane.f32.xlu0 %v1369
    %v1371 = vpop.xlane.xlu0 %1370
    %v1372 = vsel %vm1303, %v1022, -inf
    %v1373 = vmax.f32 %v1020, %v1372
    %1374 = vmax.xlane.f32.xlu0 %v1373
    %v1375 = vpop.xlane.xlu0 %1374
    %v1376 = vsel %vm1303, %v1028, -inf
    %v1377 = vmax.f32 %v1026, %v1376
    %1378 = vmax.xlane.f32.xlu0 %v1377
    %v1379 = vpop.xlane.xlu0 %1378
    %v1380 = vsel %vm1303, %v1034, -inf
    %v1381 = vmax.f32 %v1032, %v1380
    %1382 = vmax.xlane.f32.xlu0 %v1381
    %v1383 = vpop.xlane.xlu0 %1382
    %v1384 = vsel %vm1303, %v1105, -inf
    %v1385 = vmax.f32 %v1103, %v1384
    %1386 = vmax.xlane.f32.xlu0 %v1385
    %v1387 = vpop.xlane.xlu0 %1386
    %v1388 = vsel %vm1303, %v1111, -inf
    %v1389 = vmax.f32 %v1109, %v1388
    %1390 = vmax.xlane.f32.xlu0 %v1389
    %v1391 = vpop.xlane.xlu0 %1390
    %v1392 = vsel %vm1303, %v1117, -inf
    %v1393 = vmax.f32 %v1115, %v1392
    %1394 = vmax.xlane.f32.xlu0 %v1393
    %v1395 = vpop.xlane.xlu0 %1394
    %v1396 = vsel %vm1303, %v1123, -inf
    %v1397 = vmax.f32 %v1121, %v1396
    %1398 = vmax.xlane.f32.xlu0 %v1397
    %v1399 = vpop.xlane.xlu0 %1398
    %v1400 = vsel %vm1303, %v1194, -inf
    %v1401 = vmax.f32 %v1192, %v1400
    %1402 = vmax.xlane.f32.xlu0 %v1401
    %v1403 = vpop.xlane.xlu0 %1402
    %v1404 = vsel %vm1303, %v1200, -inf
    %v1405 = vmax.f32 %v1198, %v1404
    %1406 = vmax.xlane.f32.xlu0 %v1405
    %v1407 = vpop.xlane.xlu0 %1406
    %v1408 = vsel %vm1303, %v1206, -inf
    %v1409 = vmax.f32 %v1204, %v1408
    %1410 = vmax.xlane.f32.xlu0 %v1409
    %v1411 = vpop.xlane.xlu0 %1410
    %v1412 = vsel %vm1303, %v1212, -inf
    %v1413 = vmax.f32 %v1210, %v1412
    %1414 = vmax.xlane.f32.xlu0 %v1413
    %v1415 = vpop.xlane.xlu0 %1414
    %v1416 = vsel %vm1303, %v1283, -inf
    %v1417 = vmax.f32 %v1281, %v1416
    %1418 = vmax.xlane.f32.xlu0 %v1417
    %v1419 = vpop.xlane.xlu0 %1418
    %v1420 = vsel %vm1303, %v1289, -inf
    %v1421 = vmax.f32 %v1287, %v1420
    %1422 = vmax.xlane.f32.xlu0 %v1421
    %v1423 = vpop.xlane.xlu0 %1422
    %v1424 = vsel %vm1303, %v1295, -inf
    %v1425 = vmax.f32 %v1293, %v1424
    %1426 = vmax.xlane.f32.xlu0 %v1425
    %v1427 = vpop.xlane.xlu0 %1426
    %v1428 = vsel %vm1303, %v1301, -inf
    %v1429 = vmax.f32 %v1299, %v1428
    %1430 = vmax.xlane.f32.xlu0 %v1429
    %v1431 = vpop.xlane.xlu0 %1430
    %v1432 = vmax.f32 %v1307, %v1311
    %v1433 = vmax.f32 %v1323, %v1327
    %v1434 = vmax.f32 %v1339, %v1343
    %v1435 = vmax.f32 %v1355, %v1359
    %v1436 = vmax.f32 %v1371, %v1375
    %v1437 = vmax.f32 %v1387, %v1391
    %v1438 = vmax.f32 %v1403, %v1407
    %v1439 = vmax.f32 %v1419, %v1423
    %v1440 = vmax.f32 %v1432, %v1315
    %v1441 = vmax.f32 %v1433, %v1331
    %v1442 = vmax.f32 %v1434, %v1347
    %v1443 = vmax.f32 %v1435, %v1363
    %v1444 = vmax.f32 %v1436, %v1379
    %v1445 = vmax.f32 %v1437, %v1395
    %v1446 = vmax.f32 %v1438, %v1411
    %v1447 = vmax.f32 %v1439, %v1427
    %v1448 = vmax.f32 %v1440, %v1319
    %v1449 = vmax.f32 %v1441, %v1335
    %v1450 = vmax.f32 %v1442, %v1351
    %v1451 = vmax.f32 %v1443, %v1367
    %v1452 = vmax.f32 %v1444, %v1383
    %v1453 = vmax.f32 %v1445, %v1399
    %v1454 = vmax.f32 %v1446, %v1415
    %v1455 = vmax.f32 %v1447, %v1431
    %1457 = vset.pattern.permute.xlu0 0
    %1458 = vperm.xlu0 %1457, %v1448
    %v1459 = vpop.permute.xlu0 %1458
    %1462 = vset.pattern.permute.xlu0 0
    %1463 = vperm.xlu0 %1462, %v1449
    %v1464 = vpop.permute.xlu0 %1463
    %1467 = vset.pattern.permute.xlu0 0
    %1468 = vperm.xlu0 %1467, %v1450
    %v1469 = vpop.permute.xlu0 %1468
    %1472 = vset.pattern.permute.xlu0 0
    %1473 = vperm.xlu0 %1472, %v1451
    %v1474 = vpop.permute.xlu0 %1473
    %1477 = vset.pattern.permute.xlu0 0
    %1478 = vperm.xlu0 %1477, %v1452
    %v1479 = vpop.permute.xlu0 %1478
    %1482 = vset.pattern.permute.xlu0 0
    %1483 = vperm.xlu0 %1482, %v1453
    %v1484 = vpop.permute.xlu0 %1483
    %1487 = vset.pattern.permute.xlu0 0
    %1488 = vperm.xlu0 %1487, %v1454
    %v1489 = vpop.permute.xlu0 %1488
    %1492 = vset.pattern.permute.xlu0 0
    %1493 = vperm.xlu0 %1492, %v1455
    %v1494 = vpop.permute.xlu0 %1493
    %v1496 = vsub.f32 %v658, %v1459
    %v1497 = vsub.f32 %v660, %v1459
    %v1498 = vsub.f32 %v664, %v1459
    %v1499 = vsub.f32 %v666, %v1459
    %v1500 = vsub.f32 %v670, %v1459
    %v1501 = vsub.f32 %v672, %v1459
    %v1502 = vsub.f32 %v676, %v1459
    %v1503 = vsub.f32 %v678, %v1459
    %v1504 = vsub.f32 %v747, %v1464
    %v1505 = vsub.f32 %v749, %v1464
    %v1506 = vsub.f32 %v753, %v1464
    %v1507 = vsub.f32 %v755, %v1464
    %v1508 = vsub.f32 %v759, %v1464
    %v1509 = vsub.f32 %v761, %v1464
    %v1510 = vsub.f32 %v765, %v1464
    %v1511 = vsub.f32 %v767, %v1464
    %v1512 = vsub.f32 %v836, %v1469
    %v1513 = vsub.f32 %v838, %v1469
    %v1514 = vsub.f32 %v842, %v1469
    %v1515 = vsub.f32 %v844, %v1469
    %v1516 = vsub.f32 %v848, %v1469
    %v1517 = vsub.f32 %v850, %v1469
    %v1518 = vsub.f32 %v854, %v1469
    %v1519 = vsub.f32 %v856, %v1469
    %v1520 = vsub.f32 %v925, %v1474
    %v1521 = vsub.f32 %v927, %v1474
    %v1522 = vsub.f32 %v931, %v1474
    %v1523 = vsub.f32 %v933, %v1474
    %v1524 = vsub.f32 %v937, %v1474
    %v1525 = vsub.f32 %v939, %v1474
    %v1526 = vsub.f32 %v943, %v1474
    %v1527 = vsub.f32 %v945, %v1474
    %v1528 = vsub.f32 %v1014, %v1479
    %v1529 = vsub.f32 %v1016, %v1479
    %v1530 = vsub.f32 %v1020, %v1479
    %v1531 = vsub.f32 %v1022, %v1479
    %v1532 = vsub.f32 %v1026, %v1479
    %v1533 = vsub.f32 %v1028, %v1479
    %v1534 = vsub.f32 %v1032, %v1479
    %v1535 = vsub.f32 %v1034, %v1479
    %v1536 = vsub.f32 %v1103, %v1484
    %v1537 = vsub.f32 %v1105, %v1484
    %v1538 = vsub.f32 %v1109, %v1484
    %v1539 = vsub.f32 %v1111, %v1484
    %v1540 = vsub.f32 %v1115, %v1484
    %v1541 = vsub.f32 %v1117, %v1484
    %v1542 = vsub.f32 %v1121, %v1484
    %v1543 = vsub.f32 %v1123, %v1484
    %v1544 = vsub.f32 %v1192, %v1489
    %v1545 = vsub.f32 %v1194, %v1489
    %v1546 = vsub.f32 %v1198, %v1489
    %v1547 = vsub.f32 %v1200, %v1489
    %v1548 = vsub.f32 %v1204, %v1489
    %v1549 = vsub.f32 %v1206, %v1489
    %v1550 = vsub.f32 %v1210, %v1489
    %v1551 = vsub.f32 %v1212, %v1489
    %v1552 = vsub.f32 %v1281, %v1494
    %v1553 = vsub.f32 %v1283, %v1494
    %v1554 = vsub.f32 %v1287, %v1494
    %v1555 = vsub.f32 %v1289, %v1494
    %v1556 = vsub.f32 %v1293, %v1494
    %v1557 = vsub.f32 %v1295, %v1494
    %v1558 = vsub.f32 %v1299, %v1494
    %v1559 = vsub.f32 %v1301, %v1494
    %v1560 = vmul.f32 %v1496, 1.442695
    %v1561 = vpow.pop %v1560
    %v1562 = vmul.f32 %v1497, 1.442695
    %v1563 = vpow.pop %v1562
    %v1564 = vmul.f32 %v1498, 1.442695
    %v1565 = vpow.pop %v1564
    %v1566 = vmul.f32 %v1499, 1.442695
    %v1567 = vpow.pop %v1566
    %v1568 = vmul.f32 %v1500, 1.442695
    %v1569 = vpow.pop %v1568
    %v1570 = vmul.f32 %v1501, 1.442695
    %v1571 = vpow.pop %v1570
    %v1572 = vmul.f32 %v1502, 1.442695
    %v1573 = vpow.pop %v1572
    %v1574 = vmul.f32 %v1503, 1.442695
    %v1575 = vpow.pop %v1574
    %v1576 = vmul.f32 %v1504, 1.442695
    %v1577 = vpow.pop %v1576
    %v1578 = vmul.f32 %v1505, 1.442695
    %v1579 = vpow.pop %v1578
    %v1580 = vmul.f32 %v1506, 1.442695
    %v1581 = vpow.pop %v1580
    %v1582 = vmul.f32 %v1507, 1.442695
    %v1583 = vpow.pop %v1582
    %v1584 = vmul.f32 %v1508, 1.442695
    %v1585 = vpow.pop %v1584
    %v1586 = vmul.f32 %v1509, 1.442695
    %v1587 = vpow.pop %v1586
    %v1588 = vmul.f32 %v1510, 1.442695
    %v1589 = vpow.pop %v1588
    %v1590 = vmul.f32 %v1511, 1.442695
    %v1591 = vpow.pop %v1590
    %v1592 = vmul.f32 %v1512, 1.442695
    %v1593 = vpow.pop %v1592
    %v1594 = vmul.f32 %v1513, 1.442695
    %v1595 = vpow.pop %v1594
    %v1596 = vmul.f32 %v1514, 1.442695
    %v1597 = vpow.pop %v1596
    %v1598 = vmul.f32 %v1515, 1.442695
    %v1599 = vpow.pop %v1598
    %v1600 = vmul.f32 %v1516, 1.442695
    %v1601 = vpow.pop %v1600
    %v1602 = vmul.f32 %v1517, 1.442695
    %v1603 = vpow.pop %v1602
    %v1604 = vmul.f32 %v1518, 1.442695
    %v1605 = vpow.pop %v1604
    %v1606 = vmul.f32 %v1519, 1.442695
    %v1607 = vpow.pop %v1606
    %v1608 = vmul.f32 %v1520, 1.442695
    %v1609 = vpow.pop %v1608
    %v1610 = vmul.f32 %v1521, 1.442695
    %v1611 = vpow.pop %v1610
    %v1612 = vmul.f32 %v1522, 1.442695
    %v1613 = vpow.pop %v1612
    %v1614 = vmul.f32 %v1523, 1.442695
    %v1615 = vpow.pop %v1614
    %v1616 = vmul.f32 %v1524, 1.442695
    %v1617 = vpow.pop %v1616
    %v1618 = vmul.f32 %v1525, 1.442695
    %v1619 = vpow.pop %v1618
    %v1620 = vmul.f32 %v1526, 1.442695
    %v1621 = vpow.pop %v1620
    %v1622 = vmul.f32 %v1527, 1.442695
    %v1623 = vpow.pop %v1622
    %v1624 = vmul.f32 %v1528, 1.442695
    %v1625 = vpow.pop %v1624
    %v1626 = vmul.f32 %v1529, 1.442695
    %v1627 = vpow.pop %v1626
    %v1628 = vmul.f32 %v1530, 1.442695
    %v1629 = vpow.pop %v1628
    %v1630 = vmul.f32 %v1531, 1.442695
    %v1631 = vpow.pop %v1630
    %v1632 = vmul.f32 %v1532, 1.442695
    %v1633 = vpow.pop %v1632
    %v1634 = vmul.f32 %v1533, 1.442695
    %v1635 = vpow.pop %v1634
    %v1636 = vmul.f32 %v1534, 1.442695
    %v1637 = vpow.pop %v1636
    %v1638 = vmul.f32 %v1535, 1.442695
    %v1639 = vpow.pop %v1638
    %v1640 = vmul.f32 %v1536, 1.442695
    %v1641 = vpow.pop %v1640
    %v1642 = vmul.f32 %v1537, 1.442695
    %v1643 = vpow.pop %v1642
    %v1644 = vmul.f32 %v1538, 1.442695
    %v1645 = vpow.pop %v1644
    %v1646 = vmul.f32 %v1539, 1.442695
    %v1647 = vpow.pop %v1646
    %v1648 = vmul.f32 %v1540, 1.442695
    %v1649 = vpow.pop %v1648
    %v1650 = vmul.f32 %v1541, 1.442695
    %v1651 = vpow.pop %v1650
    %v1652 = vmul.f32 %v1542, 1.442695
    %v1653 = vpow.pop %v1652
    %v1654 = vmul.f32 %v1543, 1.442695
    %v1655 = vpow.pop %v1654
    %v1656 = vmul.f32 %v1544, 1.442695
    %v1657 = vpow.pop %v1656
    %v1658 = vmul.f32 %v1545, 1.442695
    %v1659 = vpow.pop %v1658
    %v1660 = vmul.f32 %v1546, 1.442695
    %v1661 = vpow.pop %v1660
    %v1662 = vmul.f32 %v1547, 1.442695
    %v1663 = vpow.pop %v1662
    %v1664 = vmul.f32 %v1548, 1.442695
    %v1665 = vpow.pop %v1664
    %v1666 = vmul.f32 %v1549, 1.442695
    %v1667 = vpow.pop %v1666
    %v1668 = vmul.f32 %v1550, 1.442695
    %v1669 = vpow.pop %v1668
    %v1670 = vmul.f32 %v1551, 1.442695
    %v1671 = vpow.pop %v1670
    %v1672 = vmul.f32 %v1552, 1.442695
    %v1673 = vpow.pop %v1672
    %v1674 = vmul.f32 %v1553, 1.442695
    %v1675 = vpow.pop %v1674
    %v1676 = vmul.f32 %v1554, 1.442695
    %v1677 = vpow.pop %v1676
    %v1678 = vmul.f32 %v1555, 1.442695
    %v1679 = vpow.pop %v1678
    %v1680 = vmul.f32 %v1556, 1.442695
    %v1681 = vpow.pop %v1680
    %v1682 = vmul.f32 %v1557, 1.442695
    %v1683 = vpow.pop %v1682
    %v1684 = vmul.f32 %v1558, 1.442695
    %v1685 = vpow.pop %v1684
    %v1686 = vmul.f32 %v1559, 1.442695
    %v1687 = vpow.pop %v1686
    %v1688 = vsel %vm1303, %v1563, 0.0
    %v1689 = vadd.f32 %v1561, %v1688
    %1690 = vadd.xlane.f32.xlu0 %v1689
    %v1691 = vpop.xlane.xlu0 %1690
    %v1692 = vsel %vm1303, %v1567, 0.0
    %v1693 = vadd.f32 %v1565, %v1692
    %1694 = vadd.xlane.f32.xlu0 %v1693
    %v1695 = vpop.xlane.xlu0 %1694
    %v1696 = vsel %vm1303, %v1571, 0.0
    %v1697 = vadd.f32 %v1569, %v1696
    %1698 = vadd.xlane.f32.xlu0 %v1697
    %v1699 = vpop.xlane.xlu0 %1698
    %v1700 = vsel %vm1303, %v1575, 0.0
    %v1701 = vadd.f32 %v1573, %v1700
    %1702 = vadd.xlane.f32.xlu0 %v1701
    %v1703 = vpop.xlane.xlu0 %1702
    %v1704 = vsel %vm1303, %v1579, 0.0
    %v1705 = vadd.f32 %v1577, %v1704
    %1706 = vadd.xlane.f32.xlu0 %v1705
    %v1707 = vpop.xlane.xlu0 %1706
    %v1708 = vsel %vm1303, %v1583, 0.0
    %v1709 = vadd.f32 %v1581, %v1708
    %1710 = vadd.xlane.f32.xlu0 %v1709
    %v1711 = vpop.xlane.xlu0 %1710
    %v1712 = vsel %vm1303, %v1587, 0.0
    %v1713 = vadd.f32 %v1585, %v1712
    %1714 = vadd.xlane.f32.xlu0 %v1713
    %v1715 = vpop.xlane.xlu0 %1714
    %v1716 = vsel %vm1303, %v1591, 0.0
    %v1717 = vadd.f32 %v1589, %v1716
    %1718 = vadd.xlane.f32.xlu0 %v1717
    %v1719 = vpop.xlane.xlu0 %1718
    %v1720 = vsel %vm1303, %v1595, 0.0
    %v1721 = vadd.f32 %v1593, %v1720
    %1722 = vadd.xlane.f32.xlu0 %v1721
    %v1723 = vpop.xlane.xlu0 %1722
    %v1724 = vsel %vm1303, %v1599, 0.0
    %v1725 = vadd.f32 %v1597, %v1724
    %1726 = vadd.xlane.f32.xlu0 %v1725
    %v1727 = vpop.xlane.xlu0 %1726
    %v1728 = vsel %vm1303, %v1603, 0.0
    %v1729 = vadd.f32 %v1601, %v1728
    %1730 = vadd.xlane.f32.xlu0 %v1729
    %v1731 = vpop.xlane.xlu0 %1730
    %v1732 = vsel %vm1303, %v1607, 0.0
    %v1733 = vadd.f32 %v1605, %v1732
    %1734 = vadd.xlane.f32.xlu0 %v1733
    %v1735 = vpop.xlane.xlu0 %1734
    %v1736 = vsel %vm1303, %v1611, 0.0
    %v1737 = vadd.f32 %v1609, %v1736
    %1738 = vadd.xlane.f32.xlu0 %v1737
    %v1739 = vpop.xlane.xlu0 %1738
    %v1740 = vsel %vm1303, %v1615, 0.0
    %v1741 = vadd.f32 %v1613, %v1740
    %1742 = vadd.xlane.f32.xlu0 %v1741
    %v1743 = vpop.xlane.xlu0 %1742
    %v1744 = vsel %vm1303, %v1619, 0.0
    %v1745 = vadd.f32 %v1617, %v1744
    %1746 = vadd.xlane.f32.xlu0 %v1745
    %v1747 = vpop.xlane.xlu0 %1746
    %v1748 = vsel %vm1303, %v1623, 0.0
    %v1749 = vadd.f32 %v1621, %v1748
    %1750 = vadd.xlane.f32.xlu0 %v1749
    %v1751 = vpop.xlane.xlu0 %1750
    %v1752 = vsel %vm1303, %v1627, 0.0
    %v1753 = vadd.f32 %v1625, %v1752
    %1754 = vadd.xlane.f32.xlu0 %v1753
    %v1755 = vpop.xlane.xlu0 %1754
    %v1756 = vsel %vm1303, %v1631, 0.0
    %v1757 = vadd.f32 %v1629, %v1756
    %1758 = vadd.xlane.f32.xlu0 %v1757
    %v1759 = vpop.xlane.xlu0 %1758
    %v1760 = vsel %vm1303, %v1635, 0.0
    %v1761 = vadd.f32 %v1633, %v1760
    %1762 = vadd.xlane.f32.xlu0 %v1761
    %v1763 = vpop.xlane.xlu0 %1762
    %v1764 = vsel %vm1303, %v1639, 0.0
    %v1765 = vadd.f32 %v1637, %v1764
    %1766 = vadd.xlane.f32.xlu0 %v1765
    %v1767 = vpop.xlane.xlu0 %1766
    %v1768 = vsel %vm1303, %v1643, 0.0
    %v1769 = vadd.f32 %v1641, %v1768
    %1770 = vadd.xlane.f32.xlu0 %v1769
    %v1771 = vpop.xlane.xlu0 %1770
    %v1772 = vsel %vm1303, %v1647, 0.0
    %v1773 = vadd.f32 %v1645, %v1772
    %1774 = vadd.xlane.f32.xlu0 %v1773
    %v1775 = vpop.xlane.xlu0 %1774
    %v1776 = vsel %vm1303, %v1651, 0.0
    %v1777 = vadd.f32 %v1649, %v1776
    %1778 = vadd.xlane.f32.xlu0 %v1777
    %v1779 = vpop.xlane.xlu0 %1778
    %v1780 = vsel %vm1303, %v1655, 0.0
    %v1781 = vadd.f32 %v1653, %v1780
    %1782 = vadd.xlane.f32.xlu0 %v1781
    %v1783 = vpop.xlane.xlu0 %1782
    %v1784 = vsel %vm1303, %v1659, 0.0
    %v1785 = vadd.f32 %v1657, %v1784
    %1786 = vadd.xlane.f32.xlu0 %v1785
    %v1787 = vpop.xlane.xlu0 %1786
    %v1788 = vsel %vm1303, %v1663, 0.0
    %v1789 = vadd.f32 %v1661, %v1788
    %1790 = vadd.xlane.f32.xlu0 %v1789
    %v1791 = vpop.xlane.xlu0 %1790
    %v1792 = vsel %vm1303, %v1667, 0.0
    %v1793 = vadd.f32 %v1665, %v1792
    %1794 = vadd.xlane.f32.xlu0 %v1793
    %v1795 = vpop.xlane.xlu0 %1794
    %v1796 = vsel %vm1303, %v1671, 0.0
    %v1797 = vadd.f32 %v1669, %v1796
    %1798 = vadd.xlane.f32.xlu0 %v1797
    %v1799 = vpop.xlane.xlu0 %1798
    %v1800 = vsel %vm1303, %v1675, 0.0
    %v1801 = vadd.f32 %v1673, %v1800
    %1802 = vadd.xlane.f32.xlu0 %v1801
    %v1803 = vpop.xlane.xlu0 %1802
    %v1804 = vsel %vm1303, %v1679, 0.0
    %v1805 = vadd.f32 %v1677, %v1804
    %1806 = vadd.xlane.f32.xlu0 %v1805
    %v1807 = vpop.xlane.xlu0 %1806
    %v1808 = vsel %vm1303, %v1683, 0.0
    %v1809 = vadd.f32 %v1681, %v1808
    %1810 = vadd.xlane.f32.xlu0 %v1809
    %v1811 = vpop.xlane.xlu0 %1810
    %v1812 = vsel %vm1303, %v1687, 0.0
    %v1813 = vadd.f32 %v1685, %v1812
    %1814 = vadd.xlane.f32.xlu0 %v1813
    %v1815 = vpop.xlane.xlu0 %1814
    %v1816 = vadd.f32 %v1691, %v1695
    %v1817 = vadd.f32 %v1707, %v1711
    %v1818 = vadd.f32 %v1723, %v1727
    %v1819 = vadd.f32 %v1739, %v1743
    %v1820 = vadd.f32 %v1755, %v1759
    %v1821 = vadd.f32 %v1771, %v1775
    %v1822 = vadd.f32 %v1787, %v1791
    %v1823 = vadd.f32 %v1803, %v1807
    %v1824 = vadd.f32 %v1816, %v1699
    %v1825 = vadd.f32 %v1817, %v1715
    %v1826 = vadd.f32 %v1818, %v1731
    %v1827 = vadd.f32 %v1819, %v1747
    %v1828 = vadd.f32 %v1820, %v1763
    %v1829 = vadd.f32 %v1821, %v1779
    %v1830 = vadd.f32 %v1822, %v1795
    %v1831 = vadd.f32 %v1823, %v1811
    %v1832 = vadd.f32 %v1824, %v1703
    %v1833 = vadd.f32 %v1825, %v1719
    %v1834 = vadd.f32 %v1826, %v1735
    %v1835 = vadd.f32 %v1827, %v1751
    %v1836 = vadd.f32 %v1828, %v1767
    %v1837 = vadd.f32 %v1829, %v1783
    %v1838 = vadd.f32 %v1830, %v1799
    %v1839 = vadd.f32 %v1831, %v1815
    %v1840 = vrcp.pop %v1832
    %v1841 = vrcp.pop %v1833
    %v1842 = vrcp.pop %v1834
    %v1843 = vrcp.pop %v1835
    %v1844 = vrcp.pop %v1836
    %v1845 = vrcp.pop %v1837
    %v1846 = vrcp.pop %v1838
    %v1847 = vrcp.pop %v1839
    %1849 = vset.pattern.permute.xlu0 0
    %1850 = vperm.xlu0 %1849, %v1840
    %v1851 = vpop.permute.xlu0 %1850
    %1854 = vset.pattern.permute.xlu0 0
    %1855 = vperm.xlu0 %1854, %v1841
    %v1856 = vpop.permute.xlu0 %1855
    %1859 = vset.pattern.permute.xlu0 0
    %1860 = vperm.xlu0 %1859, %v1842
    %v1861 = vpop.permute.xlu0 %1860
    %1864 = vset.pattern.permute.xlu0 0
    %1865 = vperm.xlu0 %1864, %v1843
    %v1866 = vpop.permute.xlu0 %1865
    %1869 = vset.pattern.permute.xlu0 0
    %1870 = vperm.xlu0 %1869, %v1844
    %v1871 = vpop.permute.xlu0 %1870
    %1874 = vset.pattern.permute.xlu0 0
    %1875 = vperm.xlu0 %1874, %v1845
    %v1876 = vpop.permute.xlu0 %1875
    %1879 = vset.pattern.permute.xlu0 0
    %1880 = vperm.xlu0 %1879, %v1846
    %v1881 = vpop.permute.xlu0 %1880
    %1884 = vset.pattern.permute.xlu0 0
    %1885 = vperm.xlu0 %1884, %v1847
    %v1886 = vpop.permute.xlu0 %1885
    %v1888 = vmul.f32 %v1561, %v1851
    %v1889 = vmul.f32 %v1563, %v1851
    %v1890 = vmul.f32 %v1565, %v1851
    %v1891 = vmul.f32 %v1567, %v1851
    %v1892 = vmul.f32 %v1569, %v1851
    %v1893 = vmul.f32 %v1571, %v1851
    %v1894 = vmul.f32 %v1573, %v1851
    %v1895 = vmul.f32 %v1575, %v1851
    %v1896 = vmul.f32 %v1577, %v1856
    %v1897 = vmul.f32 %v1579, %v1856
    %v1898 = vmul.f32 %v1581, %v1856
    %v1899 = vmul.f32 %v1583, %v1856
    %v1900 = vmul.f32 %v1585, %v1856
    %v1901 = vmul.f32 %v1587, %v1856
    %v1902 = vmul.f32 %v1589, %v1856
    %v1903 = vmul.f32 %v1591, %v1856
    %v1904 = vmul.f32 %v1593, %v1861
    %v1905 = vmul.f32 %v1595, %v1861
    %v1906 = vmul.f32 %v1597, %v1861
    %v1907 = vmul.f32 %v1599, %v1861
    %v1908 = vmul.f32 %v1601, %v1861
    %v1909 = vmul.f32 %v1603, %v1861
    %v1910 = vmul.f32 %v1605, %v1861
    %v1911 = vmul.f32 %v1607, %v1861
    %v1912 = vmul.f32 %v1609, %v1866
    %v1913 = vmul.f32 %v1611, %v1866
    %v1914 = vmul.f32 %v1613, %v1866
    %v1915 = vmul.f32 %v1615, %v1866
    %v1916 = vmul.f32 %v1617, %v1866
    %v1917 = vmul.f32 %v1619, %v1866
    %v1918 = vmul.f32 %v1621, %v1866
    %v1919 = vmul.f32 %v1623, %v1866
    %v1920 = vmul.f32 %v1625, %v1871
    %v1921 = vmul.f32 %v1627, %v1871
    %v1922 = vmul.f32 %v1629, %v1871
    %v1923 = vmul.f32 %v1631, %v1871
    %v1924 = vmul.f32 %v1633, %v1871
    %v1925 = vmul.f32 %v1635, %v1871
    %v1926 = vmul.f32 %v1637, %v1871
    %v1927 = vmul.f32 %v1639, %v1871
    %v1928 = vmul.f32 %v1641, %v1876
    %v1929 = vmul.f32 %v1643, %v1876
    %v1930 = vmul.f32 %v1645, %v1876
    %v1931 = vmul.f32 %v1647, %v1876
    %v1932 = vmul.f32 %v1649, %v1876
    %v1933 = vmul.f32 %v1651, %v1876
    %v1934 = vmul.f32 %v1653, %v1876
    %v1935 = vmul.f32 %v1655, %v1876
    %v1936 = vmul.f32 %v1657, %v1881
    %v1937 = vmul.f32 %v1659, %v1881
    %v1938 = vmul.f32 %v1661, %v1881
    %v1939 = vmul.f32 %v1663, %v1881
    %v1940 = vmul.f32 %v1665, %v1881
    %v1941 = vmul.f32 %v1667, %v1881
    %v1942 = vmul.f32 %v1669, %v1881
    %v1943 = vmul.f32 %v1671, %v1881
    %v1944 = vmul.f32 %v1673, %v1886
    %v1945 = vmul.f32 %v1675, %v1886
    %v1946 = vmul.f32 %v1677, %v1886
    %v1947 = vmul.f32 %v1679, %v1886
    %v1948 = vmul.f32 %v1681, %v1886
    %v1949 = vmul.f32 %v1683, %v1886
    %v1950 = vmul.f32 %v1685, %v1886
    %v1951 = vmul.f32 %v1687, %v1886
    %v1953 = vsel %vm1303, %v1889, 0
    %v1956 = vsel %vm1303, %v1891, 0
    %v1959 = vsel %vm1303, %v1893, 0
    %v1962 = vsel %vm1303, %v1895, 0
    %vm1964 = vcmask 1046528
    %v1966 = vsel %vm1964, %v42, 0
    %1968 = vmatprep.subr.mxu0 0.0
    %1969 = vmatpush1.msra.mxu0 %v36
    %1970 = vmatprep.subr.mxu0 0.0
    %1971 = vmatpush1.msra.mxu0 %v35
    %1972 = vmatprep.subr.mxu0 0.0
    %1973 = vmatpush1.msra.mxu0 %v34
    %1974 = vmatprep.subr.mxu0 0.0
    %1975 = vmatpush1.msra.mxu0 %v33
    %1976 = vmatprep.subr.mxu0 0.0
    %1977 = vmatpush1.msra.mxu0 %v32
    %1978 = vmatprep.subr.mxu0 0.0
    %1979 = vmatpush1.msra.mxu0 %v31
    %1980 = vmatprep.subr.mxu0 0.0
    %1981 = vmatpush1.msra.mxu0 %v30
    %1982 = vmatprep.subr.mxu0 0.0
    %1983 = vmatpush1.msra.mxu0 %v29
    %1984 = vmatprep.subr.mxu0 0.0
    %1985 = vmatpush1.msra.mxu0 %v28
    %1986 = vmatprep.subr.mxu0 0.0
    %1987 = vmatpush1.msra.mxu0 %v27
    %1988 = vmatprep.subr.mxu0 0.0
    %1989 = vmatpush1.msra.mxu0 %v26
    %1990 = vmatprep.subr.mxu0 0.0
    %1991 = vmatpush1.msra.mxu0 %v25
    %1992 = vmatprep.subr.mxu0 0.0
    %1993 = vmatpush1.msra.mxu0 %v24
    %1994 = vmatprep.subr.mxu0 0.0
    %1995 = vmatpush1.msra.mxu0 %v23
    %1996 = vmatprep.subr.mxu0 0.0
    %1997 = vmatpush1.msra.mxu0 %v22
    %1998 = vmatprep.subr.mxu0 0.0
    %1999 = vmatpush1.msra.mxu0 %v21
    %2000 = vmatprep.subr.mxu0 0.0
    %2001 = vmatpush2.msra.mxu0 0.0
    %2002 = vmatprep.subr.mxu0 0.0
    %2003 = vmatpush2.msra.mxu0 0.0
    %2004 = vmatprep.subr.mxu0 0.0
    %2005 = vmatpush2.msra.mxu0 0.0
    %2006 = vmatprep.subr.mxu0 0.0
    %2007 = vmatpush2.msra.mxu0 0.0
    %2008 = vmatprep.subr.mxu0 0.0
    %2009 = vmatpush2.msra.mxu0 0.0
    %2010 = vmatprep.subr.mxu0 0.0
    %2011 = vmatpush2.msra.mxu0 0.0
    %2012 = vmatprep.subr.mxu0 0.0
    %2013 = vmatpush2.msra.mxu0 0.0
    %2014 = vmatprep.subr.mxu0 0.0
    %2015 = vmatpush2.msra.mxu0 0.0
    %2016 = vmatprep.subr.mxu0 0.0
    %2017 = vmatpush2.msra.mxu0 0.0
    %2018 = vmatprep.subr.mxu0 0.0
    %2019 = vmatpush2.msra.mxu0 0.0
    %2020 = vmatprep.subr.mxu0 0.0
    %2021 = vmatpush2.msra.mxu0 %v1966
    %2022 = vmatprep.subr.mxu0 0.0
    %2023 = vmatpush2.msra.mxu0 %v41
    %2024 = vmatprep.subr.mxu0 0.0
    %2025 = vmatpush2.msra.mxu0 %v40
    %2026 = vmatprep.subr.mxu0 0.0
    %2027 = vmatpush2.msra.mxu0 %v39
    %2028 = vmatprep.subr.mxu0 0.0
    %2029 = vmatpush2.msra.mxu0 %v38
    %2030 = vmatprep.subr.mxu0 0.0
    %2031 = vmatpush2.msra.mxu0 %v37
    %2032 = vmatprep.mubr.f32.mxu0 %v1953
    %2033 = vmatmul.mubr.f32.gmra.mxu0 %v1888
    %v2034 = vpop.f32.mrf.mxu0
    %v2035 = vadd.f32 0.0, %v2034
    %v2036 = vpop.f32.mrf.mxu0
    %2037 = vmatprep.mubr.f32.mxu0 %v1956
    %2038 = vmatmul.mubr.f32.gmra.mxu0 %v1890
    %v2039 = vpop.f32.mrf.mxu0
    %v2040 = vadd.f32 0.0, %v2039
    %v2041 = vpop.f32.mrf.mxu0
    %2042 = vmatprep.mubr.f32.mxu0 %v1959
    %2043 = vmatmul.mubr.f32.gmra.mxu0 %v1892
    %v2044 = vpop.f32.mrf.mxu0
    %v2045 = vadd.f32 0.0, %v2044
    %v2046 = vpop.f32.mrf.mxu0
    %2047 = vmatprep.mubr.f32.mxu0 %v1962
    %2048 = vmatmul.mubr.f32.gmra.mxu0 %v1894
    %v2049 = vpop.f32.mrf.mxu0
    %v2050 = vadd.f32 0.0, %v2049
    %v2051 = vpop.f32.mrf.mxu0
    %2052 = vdwg.mxu0
    %v2054 = vsel %vm1303, %v1897, 0
    %v2057 = vsel %vm1303, %v1899, 0
    %v2060 = vsel %vm1303, %v1901, 0
    %v2063 = vsel %vm1303, %v1903, 0
    %v2066 = vsel %vm1964, %v64, 0
    %2068 = vmatprep.subr.mxu0 0.0
    %2069 = vmatpush1.msra.mxu0 %v58
    %2070 = vmatprep.subr.mxu0 0.0
    %2071 = vmatpush1.msra.mxu0 %v57
    %2072 = vmatprep.subr.mxu0 0.0
    %2073 = vmatpush1.msra.mxu0 %v56
    %2074 = vmatprep.subr.mxu0 0.0
    %2075 = vmatpush1.msra.mxu0 %v55
    %2076 = vmatprep.subr.mxu0 0.0
    %2077 = vmatpush1.msra.mxu0 %v54
    %2078 = vmatprep.subr.mxu0 0.0
    %2079 = vmatpush1.msra.mxu0 %v53
    %2080 = vmatprep.subr.mxu0 0.0
    %2081 = vmatpush1.msra.mxu0 %v52
    %2082 = vmatprep.subr.mxu0 0.0
    %2083 = vmatpush1.msra.mxu0 %v51
    %2084 = vmatprep.subr.mxu0 0.0
    %2085 = vmatpush1.msra.mxu0 %v50
    %2086 = vmatprep.subr.mxu0 0.0
    %2087 = vmatpush1.msra.mxu0 %v49
    %2088 = vmatprep.subr.mxu0 0.0
    %2089 = vmatpush1.msra.mxu0 %v48
    %2090 = vmatprep.subr.mxu0 0.0
    %2091 = vmatpush1.msra.mxu0 %v47
    %2092 = vmatprep.subr.mxu0 0.0
    %2093 = vmatpush1.msra.mxu0 %v46
    %2094 = vmatprep.subr.mxu0 0.0
    %2095 = vmatpush1.msra.mxu0 %v45
    %2096 = vmatprep.subr.mxu0 0.0
    %2097 = vmatpush1.msra.mxu0 %v44
    %2098 = vmatprep.subr.mxu0 0.0
    %2099 = vmatpush1.msra.mxu0 %v43
    %2100 = vmatprep.subr.mxu0 0.0
    %2101 = vmatpush2.msra.mxu0 0.0
    %2102 = vmatprep.subr.mxu0 0.0
    %2103 = vmatpush2.msra.mxu0 0.0
    %2104 = vmatprep.subr.mxu0 0.0
    %2105 = vmatpush2.msra.mxu0 0.0
    %2106 = vmatprep.subr.mxu0 0.0
    %2107 = vmatpush2.msra.mxu0 0.0
    %2108 = vmatprep.subr.mxu0 0.0
    %2109 = vmatpush2.msra.mxu0 0.0
    %2110 = vmatprep.subr.mxu0 0.0
    %2111 = vmatpush2.msra.mxu0 0.0
    %2112 = vmatprep.subr.mxu0 0.0
    %2113 = vmatpush2.msra.mxu0 0.0
    %2114 = vmatprep.subr.mxu0 0.0
    %2115 = vmatpush2.msra.mxu0 0.0
    %2116 = vmatprep.subr.mxu0 0.0
    %2117 = vmatpush2.msra.mxu0 0.0
    %2118 = vmatprep.subr.mxu0 0.0
    %2119 = vmatpush2.msra.mxu0 0.0
    %2120 = vmatprep.subr.mxu0 0.0
    %2121 = vmatpush2.msra.mxu0 %v2066
    %2122 = vmatprep.subr.mxu0 0.0
    %2123 = vmatpush2.msra.mxu0 %v63
    %2124 = vmatprep.subr.mxu0 0.0
    %2125 = vmatpush2.msra.mxu0 %v62
    %2126 = vmatprep.subr.mxu0 0.0
    %2127 = vmatpush2.msra.mxu0 %v61
    %2128 = vmatprep.subr.mxu0 0.0
    %2129 = vmatpush2.msra.mxu0 %v60
    %2130 = vmatprep.subr.mxu0 0.0
    %2131 = vmatpush2.msra.mxu0 %v59
    %2132 = vmatprep.mubr.f32.mxu0 %v2054
    %2133 = vmatmul.mubr.f32.gmra.mxu0 %v1896
    %v2134 = vpop.f32.mrf.mxu0
    %v2135 = vadd.f32 0.0, %v2134
    %v2136 = vpop.f32.mrf.mxu0
    %2137 = vmatprep.mubr.f32.mxu0 %v2057
    %2138 = vmatmul.mubr.f32.gmra.mxu0 %v1898
    %v2139 = vpop.f32.mrf.mxu0
    %v2140 = vadd.f32 0.0, %v2139
    %v2141 = vpop.f32.mrf.mxu0
    %2142 = vmatprep.mubr.f32.mxu0 %v2060
    %2143 = vmatmul.mubr.f32.gmra.mxu0 %v1900
    %v2144 = vpop.f32.mrf.mxu0
    %v2145 = vadd.f32 0.0, %v2144
    %v2146 = vpop.f32.mrf.mxu0
    %2147 = vmatprep.mubr.f32.mxu0 %v2063
    %2148 = vmatmul.mubr.f32.gmra.mxu0 %v1902
    %v2149 = vpop.f32.mrf.mxu0
    %v2150 = vadd.f32 0.0, %v2149
    %v2151 = vpop.f32.mrf.mxu0
    %2152 = vdwg.mxu0
    %v2154 = vsel %vm1303, %v1905, 0
    %v2157 = vsel %vm1303, %v1907, 0
    %v2160 = vsel %vm1303, %v1909, 0
    %v2163 = vsel %vm1303, %v1911, 0
    %v2166 = vsel %vm1964, %v86, 0
    %2168 = vmatprep.subr.mxu0 0.0
    %2169 = vmatpush1.msra.mxu0 %v80
    %2170 = vmatprep.subr.mxu0 0.0
    %2171 = vmatpush1.msra.mxu0 %v79
    %2172 = vmatprep.subr.mxu0 0.0
    %2173 = vmatpush1.msra.mxu0 %v78
    %2174 = vmatprep.subr.mxu0 0.0
    %2175 = vmatpush1.msra.mxu0 %v77
    %2176 = vmatprep.subr.mxu0 0.0
    %2177 = vmatpush1.msra.mxu0 %v76
    %2178 = vmatprep.subr.mxu0 0.0
    %2179 = vmatpush1.msra.mxu0 %v75
    %2180 = vmatprep.subr.mxu0 0.0
    %2181 = vmatpush1.msra.mxu0 %v74
    %2182 = vmatprep.subr.mxu0 0.0
    %2183 = vmatpush1.msra.mxu0 %v73
    %2184 = vmatprep.subr.mxu0 0.0
    %2185 = vmatpush1.msra.mxu0 %v72
    %2186 = vmatprep.subr.mxu0 0.0
    %2187 = vmatpush1.msra.mxu0 %v71
    %2188 = vmatprep.subr.mxu0 0.0
    %2189 = vmatpush1.msra.mxu0 %v70
    %2190 = vmatprep.subr.mxu0 0.0
    %2191 = vmatpush1.msra.mxu0 %v69
    %2192 = vmatprep.subr.mxu0 0.0
    %2193 = vmatpush1.msra.mxu0 %v68
    %2194 = vmatprep.subr.mxu0 0.0
    %2195 = vmatpush1.msra.mxu0 %v67
    %2196 = vmatprep.subr.mxu0 0.0
    %2197 = vmatpush1.msra.mxu0 %v66
    %2198 = vmatprep.subr.mxu0 0.0
    %2199 = vmatpush1.msra.mxu0 %v65
    %2200 = vmatprep.subr.mxu0 0.0
    %2201 = vmatpush2.msra.mxu0 0.0
    %2202 = vmatprep.subr.mxu0 0.0
    %2203 = vmatpush2.msra.mxu0 0.0
    %2204 = vmatprep.subr.mxu0 0.0
    %2205 = vmatpush2.msra.mxu0 0.0
    %2206 = vmatprep.subr.mxu0 0.0
    %2207 = vmatpush2.msra.mxu0 0.0
    %2208 = vmatprep.subr.mxu0 0.0
    %2209 = vmatpush2.msra.mxu0 0.0
    %2210 = vmatprep.subr.mxu0 0.0
    %2211 = vmatpush2.msra.mxu0 0.0
    %2212 = vmatprep.subr.mxu0 0.0
    %2213 = vmatpush2.msra.mxu0 0.0
    %2214 = vmatprep.subr.mxu0 0.0
    %2215 = vmatpush2.msra.mxu0 0.0
    %2216 = vmatprep.subr.mxu0 0.0
    %2217 = vmatpush2.msra.mxu0 0.0
    %2218 = vmatprep.subr.mxu0 0.0
    %2219 = vmatpush2.msra.mxu0 0.0
    %2220 = vmatprep.subr.mxu0 0.0
    %2221 = vmatpush2.msra.mxu0 %v2166
    %2222 = vmatprep.subr.mxu0 0.0
    %2223 = vmatpush2.msra.mxu0 %v85
    %2224 = vmatprep.subr.mxu0 0.0
    %2225 = vmatpush2.msra.mxu0 %v84
    %2226 = vmatprep.subr.mxu0 0.0
    %2227 = vmatpush2.msra.mxu0 %v83
    %2228 = vmatprep.subr.mxu0 0.0
    %2229 = vmatpush2.msra.mxu0 %v82
    %2230 = vmatprep.subr.mxu0 0.0
    %2231 = vmatpush2.msra.mxu0 %v81
    %2232 = vmatprep.mubr.f32.mxu0 %v2154
    %2233 = vmatmul.mubr.f32.gmra.mxu0 %v1904
    %v2234 = vpop.f32.mrf.mxu0
    %v2235 = vadd.f32 0.0, %v2234
    %v2236 = vpop.f32.mrf.mxu0
    %2237 = vmatprep.mubr.f32.mxu0 %v2157
    %2238 = vmatmul.mubr.f32.gmra.mxu0 %v1906
    %v2239 = vpop.f32.mrf.mxu0
    %v2240 = vadd.f32 0.0, %v2239
    %v2241 = vpop.f32.mrf.mxu0
    %2242 = vmatprep.mubr.f32.mxu0 %v2160
    %2243 = vmatmul.mubr.f32.gmra.mxu0 %v1908
    %v2244 = vpop.f32.mrf.mxu0
    %v2245 = vadd.f32 0.0, %v2244
    %v2246 = vpop.f32.mrf.mxu0
    %2247 = vmatprep.mubr.f32.mxu0 %v2163
    %2248 = vmatmul.mubr.f32.gmra.mxu0 %v1910
    %v2249 = vpop.f32.mrf.mxu0
    %v2250 = vadd.f32 0.0, %v2249
    %v2251 = vpop.f32.mrf.mxu0
    %2252 = vdwg.mxu0
    %v2254 = vsel %vm1303, %v1913, 0
    %v2257 = vsel %vm1303, %v1915, 0
    %v2260 = vsel %vm1303, %v1917, 0
    %v2263 = vsel %vm1303, %v1919, 0
    %v2266 = vsel %vm1964, %v108, 0
    %2268 = vmatprep.subr.mxu0 0.0
    %2269 = vmatpush1.msra.mxu0 %v102
    %2270 = vmatprep.subr.mxu0 0.0
    %2271 = vmatpush1.msra.mxu0 %v101
    %2272 = vmatprep.subr.mxu0 0.0
    %2273 = vmatpush1.msra.mxu0 %v100
    %2274 = vmatprep.subr.mxu0 0.0
    %2275 = vmatpush1.msra.mxu0 %v99
    %2276 = vmatprep.subr.mxu0 0.0
    %2277 = vmatpush1.msra.mxu0 %v98
    %2278 = vmatprep.subr.mxu0 0.0
    %2279 = vmatpush1.msra.mxu0 %v97
    %2280 = vmatprep.subr.mxu0 0.0
    %2281 = vmatpush1.msra.mxu0 %v96
    %2282 = vmatprep.subr.mxu0 0.0
    %2283 = vmatpush1.msra.mxu0 %v95
    %2284 = vmatprep.subr.mxu0 0.0
    %2285 = vmatpush1.msra.mxu0 %v94
    %2286 = vmatprep.subr.mxu0 0.0
    %2287 = vmatpush1.msra.mxu0 %v93
    %2288 = vmatprep.subr.mxu0 0.0
    %2289 = vmatpush1.msra.mxu0 %v92
    %2290 = vmatprep.subr.mxu0 0.0
    %2291 = vmatpush1.msra.mxu0 %v91
    %2292 = vmatprep.subr.mxu0 0.0
    %2293 = vmatpush1.msra.mxu0 %v90
    %2294 = vmatprep.subr.mxu0 0.0
    %2295 = vmatpush1.msra.mxu0 %v89
    %2296 = vmatprep.subr.mxu0 0.0
    %2297 = vmatpush1.msra.mxu0 %v88
    %2298 = vmatprep.subr.mxu0 0.0
    %2299 = vmatpush1.msra.mxu0 %v87
    %2300 = vmatprep.subr.mxu0 0.0
    %2301 = vmatpush2.msra.mxu0 0.0
    %2302 = vmatprep.subr.mxu0 0.0
    %2303 = vmatpush2.msra.mxu0 0.0
    %2304 = vmatprep.subr.mxu0 0.0
    %2305 = vmatpush2.msra.mxu0 0.0
    %2306 = vmatprep.subr.mxu0 0.0
    %2307 = vmatpush2.msra.mxu0 0.0
    %2308 = vmatprep.subr.mxu0 0.0
    %2309 = vmatpush2.msra.mxu0 0.0
    %2310 = vmatprep.subr.mxu0 0.0
    %2311 = vmatpush2.msra.mxu0 0.0
    %2312 = vmatprep.subr.mxu0 0.0
    %2313 = vmatpush2.msra.mxu0 0.0
    %2314 = vmatprep.subr.mxu0 0.0
    %2315 = vmatpush2.msra.mxu0 0.0
    %2316 = vmatprep.subr.mxu0 0.0
    %2317 = vmatpush2.msra.mxu0 0.0
    %2318 = vmatprep.subr.mxu0 0.0
    %2319 = vmatpush2.msra.mxu0 0.0
    %2320 = vmatprep.subr.mxu0 0.0
    %2321 = vmatpush2.msra.mxu0 %v2266
    %2322 = vmatprep.subr.mxu0 0.0
    %2323 = vmatpush2.msra.mxu0 %v107
    %2324 = vmatprep.subr.mxu0 0.0
    %2325 = vmatpush2.msra.mxu0 %v106
    %2326 = vmatprep.subr.mxu0 0.0
    %2327 = vmatpush2.msra.mxu0 %v105
    %2328 = vmatprep.subr.mxu0 0.0
    %2329 = vmatpush2.msra.mxu0 %v104
    %2330 = vmatprep.subr.mxu0 0.0
    %2331 = vmatpush2.msra.mxu0 %v103
    %2332 = vmatprep.mubr.f32.mxu0 %v2254
    %2333 = vmatmul.mubr.f32.gmra.mxu0 %v1912
    %v2334 = vpop.f32.mrf.mxu0
    %v2335 = vadd.f32 0.0, %v2334
    %v2336 = vpop.f32.mrf.mxu0
    %2337 = vmatprep.mubr.f32.mxu0 %v2257
    %2338 = vmatmul.mubr.f32.gmra.mxu0 %v1914
    %v2339 = vpop.f32.mrf.mxu0
    %v2340 = vadd.f32 0.0, %v2339
    %v2341 = vpop.f32.mrf.mxu0
    %2342 = vmatprep.mubr.f32.mxu0 %v2260
    %2343 = vmatmul.mubr.f32.gmra.mxu0 %v1916
    %v2344 = vpop.f32.mrf.mxu0
    %v2345 = vadd.f32 0.0, %v2344
    %v2346 = vpop.f32.mrf.mxu0
    %2347 = vmatprep.mubr.f32.mxu0 %v2263
    %2348 = vmatmul.mubr.f32.gmra.mxu0 %v1918
    %v2349 = vpop.f32.mrf.mxu0
    %v2350 = vadd.f32 0.0, %v2349
    %v2351 = vpop.f32.mrf.mxu0
    %2352 = vdwg.mxu0
    %v2354 = vsel %vm1303, %v1921, 0
    %v2357 = vsel %vm1303, %v1923, 0
    %v2360 = vsel %vm1303, %v1925, 0
    %v2363 = vsel %vm1303, %v1927, 0
    %v2366 = vsel %vm1964, %v130, 0
    %2368 = vmatprep.subr.mxu0 0.0
    %2369 = vmatpush1.msra.mxu0 %v124
    %2370 = vmatprep.subr.mxu0 0.0
    %2371 = vmatpush1.msra.mxu0 %v123
    %2372 = vmatprep.subr.mxu0 0.0
    %2373 = vmatpush1.msra.mxu0 %v122
    %2374 = vmatprep.subr.mxu0 0.0
    %2375 = vmatpush1.msra.mxu0 %v121
    %2376 = vmatprep.subr.mxu0 0.0
    %2377 = vmatpush1.msra.mxu0 %v120
    %2378 = vmatprep.subr.mxu0 0.0
    %2379 = vmatpush1.msra.mxu0 %v119
    %2380 = vmatprep.subr.mxu0 0.0
    %2381 = vmatpush1.msra.mxu0 %v118
    %2382 = vmatprep.subr.mxu0 0.0
    %2383 = vmatpush1.msra.mxu0 %v117
    %2384 = vmatprep.subr.mxu0 0.0
    %2385 = vmatpush1.msra.mxu0 %v116
    %2386 = vmatprep.subr.mxu0 0.0
    %2387 = vmatpush1.msra.mxu0 %v115
    %2388 = vmatprep.subr.mxu0 0.0
    %2389 = vmatpush1.msra.mxu0 %v114
    %2390 = vmatprep.subr.mxu0 0.0
    %2391 = vmatpush1.msra.mxu0 %v113
    %2392 = vmatprep.subr.mxu0 0.0
    %2393 = vmatpush1.msra.mxu0 %v112
    %2394 = vmatprep.subr.mxu0 0.0
    %2395 = vmatpush1.msra.mxu0 %v111
    %2396 = vmatprep.subr.mxu0 0.0
    %2397 = vmatpush1.msra.mxu0 %v110
    %2398 = vmatprep.subr.mxu0 0.0
    %2399 = vmatpush1.msra.mxu0 %v109
    %2400 = vmatprep.subr.mxu0 0.0
    %2401 = vmatpush2.msra.mxu0 0.0
    %2402 = vmatprep.subr.mxu0 0.0
    %2403 = vmatpush2.msra.mxu0 0.0
    %2404 = vmatprep.subr.mxu0 0.0
    %2405 = vmatpush2.msra.mxu0 0.0
    %2406 = vmatprep.subr.mxu0 0.0
    %2407 = vmatpush2.msra.mxu0 0.0
    %2408 = vmatprep.subr.mxu0 0.0
    %2409 = vmatpush2.msra.mxu0 0.0
    %2410 = vmatprep.subr.mxu0 0.0
    %2411 = vmatpush2.msra.mxu0 0.0
    %2412 = vmatprep.subr.mxu0 0.0
    %2413 = vmatpush2.msra.mxu0 0.0
    %2414 = vmatprep.subr.mxu0 0.0
    %2415 = vmatpush2.msra.mxu0 0.0
    %2416 = vmatprep.subr.mxu0 0.0
    %2417 = vmatpush2.msra.mxu0 0.0
    %2418 = vmatprep.subr.mxu0 0.0
    %2419 = vmatpush2.msra.mxu0 0.0
    %2420 = vmatprep.subr.mxu0 0.0
    %2421 = vmatpush2.msra.mxu0 %v2366
    %2422 = vmatprep.subr.mxu0 0.0
    %2423 = vmatpush2.msra.mxu0 %v129
    %2424 = vmatprep.subr.mxu0 0.0
    %2425 = vmatpush2.msra.mxu0 %v128
    %2426 = vmatprep.subr.mxu0 0.0
    %2427 = vmatpush2.msra.mxu0 %v127
    %2428 = vmatprep.subr.mxu0 0.0
    %2429 = vmatpush2.msra.mxu0 %v126
    %2430 = vmatprep.subr.mxu0 0.0
    %2431 = vmatpush2.msra.mxu0 %v125
    %2432 = vmatprep.mubr.f32.mxu0 %v2354
    %2433 = vmatmul.mubr.f32.gmra.mxu0 %v1920
    %v2434 = vpop.f32.mrf.mxu0
    %v2435 = vadd.f32 0.0, %v2434
    %v2436 = vpop.f32.mrf.mxu0
    %2437 = vmatprep.mubr.f32.mxu0 %v2357
    %2438 = vmatmul.mubr.f32.gmra.mxu0 %v1922
    %v2439 = vpop.f32.mrf.mxu0
    %v2440 = vadd.f32 0.0, %v2439
    %v2441 = vpop.f32.mrf.mxu0
    %2442 = vmatprep.mubr.f32.mxu0 %v2360
    %2443 = vmatmul.mubr.f32.gmra.mxu0 %v1924
    %v2444 = vpop.f32.mrf.mxu0
    %v2445 = vadd.f32 0.0, %v2444
    %v2446 = vpop.f32.mrf.mxu0
    %2447 = vmatprep.mubr.f32.mxu0 %v2363
    %2448 = vmatmul.mubr.f32.gmra.mxu0 %v1926
    %v2449 = vpop.f32.mrf.mxu0
    %v2450 = vadd.f32 0.0, %v2449
    %v2451 = vpop.f32.mrf.mxu0
    %2452 = vdwg.mxu0
    %v2454 = vsel %vm1303, %v1929, 0
    %v2457 = vsel %vm1303, %v1931, 0
    %v2460 = vsel %vm1303, %v1933, 0
    %v2463 = vsel %vm1303, %v1935, 0
    %v2466 = vsel %vm1964, %v152, 0
    %2468 = vmatprep.subr.mxu0 0.0
    %2469 = vmatpush1.msra.mxu0 %v146
    %2470 = vmatprep.subr.mxu0 0.0
    %2471 = vmatpush1.msra.mxu0 %v145
    %2472 = vmatprep.subr.mxu0 0.0
    %2473 = vmatpush1.msra.mxu0 %v144
    %2474 = vmatprep.subr.mxu0 0.0
    %2475 = vmatpush1.msra.mxu0 %v143
    %2476 = vmatprep.subr.mxu0 0.0
    %2477 = vmatpush1.msra.mxu0 %v142
    %2478 = vmatprep.subr.mxu0 0.0
    %2479 = vmatpush1.msra.mxu0 %v141
    %2480 = vmatprep.subr.mxu0 0.0
    %2481 = vmatpush1.msra.mxu0 %v140
    %2482 = vmatprep.subr.mxu0 0.0
    %2483 = vmatpush1.msra.mxu0 %v139
    %2484 = vmatprep.subr.mxu0 0.0
    %2485 = vmatpush1.msra.mxu0 %v138
    %2486 = vmatprep.subr.mxu0 0.0
    %2487 = vmatpush1.msra.mxu0 %v137
    %2488 = vmatprep.subr.mxu0 0.0
    %2489 = vmatpush1.msra.mxu0 %v136
    %2490 = vmatprep.subr.mxu0 0.0
    %2491 = vmatpush1.msra.mxu0 %v135
    %2492 = vmatprep.subr.mxu0 0.0
    %2493 = vmatpush1.msra.mxu0 %v134
    %2494 = vmatprep.subr.mxu0 0.0
    %2495 = vmatpush1.msra.mxu0 %v133
    %2496 = vmatprep.subr.mxu0 0.0
    %2497 = vmatpush1.msra.mxu0 %v132
    %2498 = vmatprep.subr.mxu0 0.0
    %2499 = vmatpush1.msra.mxu0 %v131
    %2500 = vmatprep.subr.mxu0 0.0
    %2501 = vmatpush2.msra.mxu0 0.0
    %2502 = vmatprep.subr.mxu0 0.0
    %2503 = vmatpush2.msra.mxu0 0.0
    %2504 = vmatprep.subr.mxu0 0.0
    %2505 = vmatpush2.msra.mxu0 0.0
    %2506 = vmatprep.subr.mxu0 0.0
    %2507 = vmatpush2.msra.mxu0 0.0
    %2508 = vmatprep.subr.mxu0 0.0
    %2509 = vmatpush2.msra.mxu0 0.0
    %2510 = vmatprep.subr.mxu0 0.0
    %2511 = vmatpush2.msra.mxu0 0.0
    %2512 = vmatprep.subr.mxu0 0.0
    %2513 = vmatpush2.msra.mxu0 0.0
    %2514 = vmatprep.subr.mxu0 0.0
    %2515 = vmatpush2.msra.mxu0 0.0
    %2516 = vmatprep.subr.mxu0 0.0
    %2517 = vmatpush2.msra.mxu0 0.0
    %2518 = vmatprep.subr.mxu0 0.0
    %2519 = vmatpush2.msra.mxu0 0.0
    %2520 = vmatprep.subr.mxu0 0.0
    %2521 = vmatpush2.msra.mxu0 %v2466
    %2522 = vmatprep.subr.mxu0 0.0
    %2523 = vmatpush2.msra.mxu0 %v151
    %2524 = vmatprep.subr.mxu0 0.0
    %2525 = vmatpush2.msra.mxu0 %v150
    %2526 = vmatprep.subr.mxu0 0.0
    %2527 = vmatpush2.msra.mxu0 %v149
    %2528 = vmatprep.subr.mxu0 0.0
    %2529 = vmatpush2.msra.mxu0 %v148
    %2530 = vmatprep.subr.mxu0 0.0
    %2531 = vmatpush2.msra.mxu0 %v147
    %2532 = vmatprep.mubr.f32.mxu0 %v2454
    %2533 = vmatmul.mubr.f32.gmra.mxu0 %v1928
    %v2534 = vpop.f32.mrf.mxu0
    %v2535 = vadd.f32 0.0, %v2534
    %v2536 = vpop.f32.mrf.mxu0
    %2537 = vmatprep.mubr.f32.mxu0 %v2457
    %2538 = vmatmul.mubr.f32.gmra.mxu0 %v1930
    %v2539 = vpop.f32.mrf.mxu0
    %v2540 = vadd.f32 0.0, %v2539
    %v2541 = vpop.f32.mrf.mxu0
    %2542 = vmatprep.mubr.f32.mxu0 %v2460
    %2543 = vmatmul.mubr.f32.gmra.mxu0 %v1932
    %v2544 = vpop.f32.mrf.mxu0
    %v2545 = vadd.f32 0.0, %v2544
    %v2546 = vpop.f32.mrf.mxu0
    %2547 = vmatprep.mubr.f32.mxu0 %v2463
    %2548 = vmatmul.mubr.f32.gmra.mxu0 %v1934
    %v2549 = vpop.f32.mrf.mxu0
    %v2550 = vadd.f32 0.0, %v2549
    %v2551 = vpop.f32.mrf.mxu0
    %2552 = vdwg.mxu0
    %v2554 = vsel %vm1303, %v1937, 0
    %v2557 = vsel %vm1303, %v1939, 0
    %v2560 = vsel %vm1303, %v1941, 0
    %v2563 = vsel %vm1303, %v1943, 0
    %v2566 = vsel %vm1964, %v174, 0
    %2568 = vmatprep.subr.mxu0 0.0
    %2569 = vmatpush1.msra.mxu0 %v168
    %2570 = vmatprep.subr.mxu0 0.0
    %2571 = vmatpush1.msra.mxu0 %v167
    %2572 = vmatprep.subr.mxu0 0.0
    %2573 = vmatpush1.msra.mxu0 %v166
    %2574 = vmatprep.subr.mxu0 0.0
    %2575 = vmatpush1.msra.mxu0 %v165
    %2576 = vmatprep.subr.mxu0 0.0
    %2577 = vmatpush1.msra.mxu0 %v164
    %2578 = vmatprep.subr.mxu0 0.0
    %2579 = vmatpush1.msra.mxu0 %v163
    %2580 = vmatprep.subr.mxu0 0.0
    %2581 = vmatpush1.msra.mxu0 %v162
    %2582 = vmatprep.subr.mxu0 0.0
    %2583 = vmatpush1.msra.mxu0 %v161
    %2584 = vmatprep.subr.mxu0 0.0
    %2585 = vmatpush1.msra.mxu0 %v160
    %2586 = vmatprep.subr.mxu0 0.0
    %2587 = vmatpush1.msra.mxu0 %v159
    %2588 = vmatprep.subr.mxu0 0.0
    %2589 = vmatpush1.msra.mxu0 %v158
    %2590 = vmatprep.subr.mxu0 0.0
    %2591 = vmatpush1.msra.mxu0 %v157
    %2592 = vmatprep.subr.mxu0 0.0
    %2593 = vmatpush1.msra.mxu0 %v156
    %2594 = vmatprep.subr.mxu0 0.0
    %2595 = vmatpush1.msra.mxu0 %v155
    %2596 = vmatprep.subr.mxu0 0.0
    %2597 = vmatpush1.msra.mxu0 %v154
    %2598 = vmatprep.subr.mxu0 0.0
    %2599 = vmatpush1.msra.mxu0 %v153
    %2600 = vmatprep.subr.mxu0 0.0
    %2601 = vmatpush2.msra.mxu0 0.0
    %2602 = vmatprep.subr.mxu0 0.0
    %2603 = vmatpush2.msra.mxu0 0.0
    %2604 = vmatprep.subr.mxu0 0.0
    %2605 = vmatpush2.msra.mxu0 0.0
    %2606 = vmatprep.subr.mxu0 0.0
    %2607 = vmatpush2.msra.mxu0 0.0
    %2608 = vmatprep.subr.mxu0 0.0
    %2609 = vmatpush2.msra.mxu0 0.0
    %2610 = vmatprep.subr.mxu0 0.0
    %2611 = vmatpush2.msra.mxu0 0.0
    %2612 = vmatprep.subr.mxu0 0.0
    %2613 = vmatpush2.msra.mxu0 0.0
    %2614 = vmatprep.subr.mxu0 0.0
    %2615 = vmatpush2.msra.mxu0 0.0
    %2616 = vmatprep.subr.mxu0 0.0
    %2617 = vmatpush2.msra.mxu0 0.0
    %2618 = vmatprep.subr.mxu0 0.0
    %2619 = vmatpush2.msra.mxu0 0.0
    %2620 = vmatprep.subr.mxu0 0.0
    %2621 = vmatpush2.msra.mxu0 %v2566
    %2622 = vmatprep.subr.mxu0 0.0
    %2623 = vmatpush2.msra.mxu0 %v173
    %2624 = vmatprep.subr.mxu0 0.0
    %2625 = vmatpush2.msra.mxu0 %v172
    %2626 = vmatprep.subr.mxu0 0.0
    %2627 = vmatpush2.msra.mxu0 %v171
    %2628 = vmatprep.subr.mxu0 0.0
    %2629 = vmatpush2.msra.mxu0 %v170
    %2630 = vmatprep.subr.mxu0 0.0
    %2631 = vmatpush2.msra.mxu0 %v169
    %2632 = vmatprep.mubr.f32.mxu0 %v2554
    %2633 = vmatmul.mubr.f32.gmra.mxu0 %v1936
    %v2634 = vpop.f32.mrf.mxu0
    %v2635 = vadd.f32 0.0, %v2634
    %v2636 = vpop.f32.mrf.mxu0
    %2637 = vmatprep.mubr.f32.mxu0 %v2557
    %2638 = vmatmul.mubr.f32.gmra.mxu0 %v1938
    %v2639 = vpop.f32.mrf.mxu0
    %v2640 = vadd.f32 0.0, %v2639
    %v2641 = vpop.f32.mrf.mxu0
    %2642 = vmatprep.mubr.f32.mxu0 %v2560
    %2643 = vmatmul.mubr.f32.gmra.mxu0 %v1940
    %v2644 = vpop.f32.mrf.mxu0
    %v2645 = vadd.f32 0.0, %v2644
    %v2646 = vpop.f32.mrf.mxu0
    %2647 = vmatprep.mubr.f32.mxu0 %v2563
    %2648 = vmatmul.mubr.f32.gmra.mxu0 %v1942
    %v2649 = vpop.f32.mrf.mxu0
    %v2650 = vadd.f32 0.0, %v2649
    %v2651 = vpop.f32.mrf.mxu0
    %2652 = vdwg.mxu0
    %v2654 = vsel %vm1303, %v1945, 0
    %v2657 = vsel %vm1303, %v1947, 0
    %v2660 = vsel %vm1303, %v1949, 0
    %v2663 = vsel %vm1303, %v1951, 0
    %v2666 = vsel %vm1964, %v196, 0
    %2668 = vmatprep.subr.mxu0 0.0
    %2669 = vmatpush1.msra.mxu0 %v190
    %2670 = vmatprep.subr.mxu0 0.0
    %2671 = vmatpush1.msra.mxu0 %v189
    %2672 = vmatprep.subr.mxu0 0.0
    %2673 = vmatpush1.msra.mxu0 %v188
    %2674 = vmatprep.subr.mxu0 0.0
    %2675 = vmatpush1.msra.mxu0 %v187
    %2676 = vmatprep.subr.mxu0 0.0
    %2677 = vmatpush1.msra.mxu0 %v186
    %2678 = vmatprep.subr.mxu0 0.0
    %2679 = vmatpush1.msra.mxu0 %v185
    %2680 = vmatprep.subr.mxu0 0.0
    %2681 = vmatpush1.msra.mxu0 %v184
    %2682 = vmatprep.subr.mxu0 0.0
    %2683 = vmatpush1.msra.mxu0 %v183
    %2684 = vmatprep.subr.mxu0 0.0
    %2685 = vmatpush1.msra.mxu0 %v182
    %2686 = vmatprep.subr.mxu0 0.0
    %2687 = vmatpush1.msra.mxu0 %v181
    %2688 = vmatprep.subr.mxu0 0.0
    %2689 = vmatpush1.msra.mxu0 %v180
    %2690 = vmatprep.subr.mxu0 0.0
    %2691 = vmatpush1.msra.mxu0 %v179
    %2692 = vmatprep.subr.mxu0 0.0
    %2693 = vmatpush1.msra.mxu0 %v178
    %2694 = vmatprep.subr.mxu0 0.0
    %2695 = vmatpush1.msra.mxu0 %v177
    %2696 = vmatprep.subr.mxu0 0.0
    %2697 = vmatpush1.msra.mxu0 %v176
    %2698 = vmatprep.subr.mxu0 0.0
    %2699 = vmatpush1.msra.mxu0 %v175
    %2700 = vmatprep.subr.mxu0 0.0
    %2701 = vmatpush2.msra.mxu0 0.0
    %2702 = vmatprep.subr.mxu0 0.0
    %2703 = vmatpush2.msra.mxu0 0.0
    %2704 = vmatprep.subr.mxu0 0.0
    %2705 = vmatpush2.msra.mxu0 0.0
    %2706 = vmatprep.subr.mxu0 0.0
    %2707 = vmatpush2.msra.mxu0 0.0
    %2708 = vmatprep.subr.mxu0 0.0
    %2709 = vmatpush2.msra.mxu0 0.0
    %2710 = vmatprep.subr.mxu0 0.0
    %2711 = vmatpush2.msra.mxu0 0.0
    %2712 = vmatprep.subr.mxu0 0.0
    %2713 = vmatpush2.msra.mxu0 0.0
    %2714 = vmatprep.subr.mxu0 0.0
    %2715 = vmatpush2.msra.mxu0 0.0
    %2716 = vmatprep.subr.mxu0 0.0
    %2717 = vmatpush2.msra.mxu0 0.0
    %2718 = vmatprep.subr.mxu0 0.0
    %2719 = vmatpush2.msra.mxu0 0.0
    %2720 = vmatprep.subr.mxu0 0.0
    %2721 = vmatpush2.msra.mxu0 %v2666
    %2722 = vmatprep.subr.mxu0 0.0
    %2723 = vmatpush2.msra.mxu0 %v195
    %2724 = vmatprep.subr.mxu0 0.0
    %2725 = vmatpush2.msra.mxu0 %v194
    %2726 = vmatprep.subr.mxu0 0.0
    %2727 = vmatpush2.msra.mxu0 %v193
    %2728 = vmatprep.subr.mxu0 0.0
    %2729 = vmatpush2.msra.mxu0 %v192
    %2730 = vmatprep.subr.mxu0 0.0
    %2731 = vmatpush2.msra.mxu0 %v191
    %2732 = vmatprep.mubr.f32.mxu0 %v2654
    %2733 = vmatmul.mubr.f32.gmra.mxu0 %v1944
    %v2734 = vpop.f32.mrf.mxu0
    %v2735 = vadd.f32 0.0, %v2734
    %v2736 = vpop.f32.mrf.mxu0
    %2737 = vmatprep.mubr.f32.mxu0 %v2657
    %2738 = vmatmul.mubr.f32.gmra.mxu0 %v1946
    %v2739 = vpop.f32.mrf.mxu0
    %v2740 = vadd.f32 0.0, %v2739
    %v2741 = vpop.f32.mrf.mxu0
    %2742 = vmatprep.mubr.f32.mxu0 %v2660
    %2743 = vmatmul.mubr.f32.gmra.mxu0 %v1948
    %v2744 = vpop.f32.mrf.mxu0
    %v2745 = vadd.f32 0.0, %v2744
    %v2746 = vpop.f32.mrf.mxu0
    %2747 = vmatprep.mubr.f32.mxu0 %v2663
    %2748 = vmatmul.mubr.f32.gmra.mxu0 %v1950
    %v2749 = vpop.f32.mrf.mxu0
    %v2750 = vadd.f32 0.0, %v2749
    %v2751 = vpop.f32.mrf.mxu0
    %2752 = vdwg.mxu0
    %2761 = vrot.lane.b32.xlu0 %v2040, 96
    %v2762 = vpop.permute.xlu0 %2761
    %2763 = vrot.lane.b32.xlu0 %v2140, 96
    %v2764 = vpop.permute.xlu0 %2763
    %2765 = vrot.lane.b32.xlu0 %v2240, 96
    %v2766 = vpop.permute.xlu0 %2765
    %2767 = vrot.lane.b32.xlu0 %v2340, 96
    %v2768 = vpop.permute.xlu0 %2767
    %2769 = vrot.lane.b32.xlu0 %v2440, 96
    %v2770 = vpop.permute.xlu0 %2769
    %2771 = vrot.lane.b32.xlu0 %v2540, 96
    %v2772 = vpop.permute.xlu0 %2771
    %2773 = vrot.lane.b32.xlu0 %v2640, 96
    %v2774 = vpop.permute.xlu0 %2773
    %2775 = vrot.lane.b32.xlu0 %v2740, 96
    %v2776 = vpop.permute.xlu0 %2775
    %v2785 = vadd.f32 %v2035, %v2762
    %v2786 = vadd.f32 %v2135, %v2764
    %v2787 = vadd.f32 %v2235, %v2766
    %v2788 = vadd.f32 %v2335, %v2768
    %v2789 = vadd.f32 %v2435, %v2770
    %v2790 = vadd.f32 %v2535, %v2772
    %v2791 = vadd.f32 %v2635, %v2774
    %v2792 = vadd.f32 %v2735, %v2776
    %2801 = vrot.lane.b32.xlu0 %v2045, 64
    %v2802 = vpop.permute.xlu0 %2801
    %2803 = vrot.lane.b32.xlu0 %v2145, 64
    %v2804 = vpop.permute.xlu0 %2803
    %2805 = vrot.lane.b32.xlu0 %v2245, 64
    %v2806 = vpop.permute.xlu0 %2805
    %2807 = vrot.lane.b32.xlu0 %v2345, 64
    %v2808 = vpop.permute.xlu0 %2807
    %2809 = vrot.lane.b32.xlu0 %v2445, 64
    %v2810 = vpop.permute.xlu0 %2809
    %2811 = vrot.lane.b32.xlu0 %v2545, 64
    %v2812 = vpop.permute.xlu0 %2811
    %2813 = vrot.lane.b32.xlu0 %v2645, 64
    %v2814 = vpop.permute.xlu0 %2813
    %2815 = vrot.lane.b32.xlu0 %v2745, 64
    %v2816 = vpop.permute.xlu0 %2815
    %v2825 = vadd.f32 %v2785, %v2802
    %v2826 = vadd.f32 %v2786, %v2804
    %v2827 = vadd.f32 %v2787, %v2806
    %v2828 = vadd.f32 %v2788, %v2808
    %v2829 = vadd.f32 %v2789, %v2810
    %v2830 = vadd.f32 %v2790, %v2812
    %v2831 = vadd.f32 %v2791, %v2814
    %v2832 = vadd.f32 %v2792, %v2816
    %2841 = vrot.lane.b32.xlu0 %v2050, 32
    %v2842 = vpop.permute.xlu0 %2841
    %2843 = vrot.lane.b32.xlu0 %v2150, 32
    %v2844 = vpop.permute.xlu0 %2843
    %2845 = vrot.lane.b32.xlu0 %v2250, 32
    %v2846 = vpop.permute.xlu0 %2845
    %2847 = vrot.lane.b32.xlu0 %v2350, 32
    %v2848 = vpop.permute.xlu0 %2847
    %2849 = vrot.lane.b32.xlu0 %v2450, 32
    %v2850 = vpop.permute.xlu0 %2849
    %2851 = vrot.lane.b32.xlu0 %v2550, 32
    %v2852 = vpop.permute.xlu0 %2851
    %2853 = vrot.lane.b32.xlu0 %v2650, 32
    %v2854 = vpop.permute.xlu0 %2853
    %2855 = vrot.lane.b32.xlu0 %v2750, 32
    %v2856 = vpop.permute.xlu0 %2855
    %v2865 = vadd.f32 %v2825, %v2842
    %v2866 = vadd.f32 %v2826, %v2844
    %v2867 = vadd.f32 %v2827, %v2846
    %v2868 = vadd.f32 %v2828, %v2848
    %v2869 = vadd.f32 %v2829, %v2850
    %v2870 = vadd.f32 %v2830, %v2852
    %v2871 = vadd.f32 %v2831, %v2854
    %v2872 = vadd.f32 %v2832, %v2856
    %v2873 = vcombine.low %v2865, %v2867
    %v2874 = vcombine.high %v2865, %v2867
    %v2876 = vunpack.c.l.s4 1983009808
    %v2877 = vunpack.c.0.s8 %v2876
    %v2878 = vlaneseq
    %v2879 = vshrl.u32 %v2878, 7
    %v2880 = vsub.s32 %v2877, %v2879
    %v2881 = vrot.slane %v2873, %v2880
    %v2883 = vunpack.c.l.s4 1983009808
    %v2884 = vunpack.c.0.s8 %v2883
    %v2885 = vlaneseq
    %v2886 = vshrl.u32 %v2885, 7
    %v2887 = vsub.s32 %v2884, %v2886
    %v2888 = vrot.slane %v2874, %v2887
    %v2889 = vcombine.low %v2866, %v2868
    %v2890 = vcombine.high %v2866, %v2868
    %v2892 = vunpack.c.l.s4 1983009808
    %v2893 = vunpack.c.0.s8 %v2892
    %v2894 = vlaneseq
    %v2895 = vshrl.u32 %v2894, 7
    %v2896 = vsub.s32 %v2893, %v2895
    %v2897 = vrot.slane %v2889, %v2896
    %v2899 = vunpack.c.l.s4 1983009808
    %v2900 = vunpack.c.0.s8 %v2899
    %v2901 = vlaneseq
    %v2902 = vshrl.u32 %v2901, 7
    %v2903 = vsub.s32 %v2900, %v2902
    %v2904 = vrot.slane %v2890, %v2903
    %v2905 = vcombine.low %v2869, %v2871
    %v2906 = vcombine.high %v2869, %v2871
    %v2908 = vunpack.c.l.s4 1983009808
    %v2909 = vunpack.c.0.s8 %v2908
    %v2910 = vlaneseq
    %v2911 = vshrl.u32 %v2910, 7
    %v2912 = vsub.s32 %v2909, %v2911
    %v2913 = vrot.slane %v2905, %v2912
    %v2915 = vunpack.c.l.s4 1983009808
    %v2916 = vunpack.c.0.s8 %v2915
    %v2917 = vlaneseq
    %v2918 = vshrl.u32 %v2917, 7
    %v2919 = vsub.s32 %v2916, %v2918
    %v2920 = vrot.slane %v2906, %v2919
    %v2921 = vcombine.low %v2870, %v2872
    %v2922 = vcombine.high %v2870, %v2872
    %v2924 = vunpack.c.l.s4 1983009808
    %v2925 = vunpack.c.0.s8 %v2924
    %v2926 = vlaneseq
    %v2927 = vshrl.u32 %v2926, 7
    %v2928 = vsub.s32 %v2925, %v2927
    %v2929 = vrot.slane %v2921, %v2928
    %v2931 = vunpack.c.l.s4 1983009808
    %v2932 = vunpack.c.0.s8 %v2931
    %v2933 = vlaneseq
    %v2934 = vshrl.u32 %v2933, 7
    %v2935 = vsub.s32 %v2932, %v2934
    %v2936 = vrot.slane %v2922, %v2935
    %v2937 = vcombine.low %v2881, %v2897
    %v2938 = vcombine.high %v2881, %v2897
    %v2940 = vunpack.c.l.s4 1934713408
    %v2941 = vunpack.c.0.s8 %v2940
    %v2942 = vlaneseq
    %v2943 = vshrl.u32 %v2942, 7
    %v2944 = vsub.s32 %v2941, %v2943
    %v2945 = vrot.slane %v2937, %v2944
    %v2947 = vunpack.c.l.s4 1934713408
    %v2948 = vunpack.c.0.s8 %v2947
    %v2949 = vlaneseq
    %v2950 = vshrl.u32 %v2949, 7
    %v2951 = vsub.s32 %v2948, %v2950
    %v2952 = vrot.slane %v2938, %v2951
    %v2953 = vcombine.low %v2888, %v2904
    %v2954 = vcombine.high %v2888, %v2904
    %v2956 = vunpack.c.l.s4 1934713408
    %v2957 = vunpack.c.0.s8 %v2956
    %v2958 = vlaneseq
    %v2959 = vshrl.u32 %v2958, 7
    %v2960 = vsub.s32 %v2957, %v2959
    %v2961 = vrot.slane %v2953, %v2960
    %v2963 = vunpack.c.l.s4 1934713408
    %v2964 = vunpack.c.0.s8 %v2963
    %v2965 = vlaneseq
    %v2966 = vshrl.u32 %v2965, 7
    %v2967 = vsub.s32 %v2964, %v2966
    %v2968 = vrot.slane %v2954, %v2967
    %v2969 = vcombine.low %v2913, %v2929
    %v2970 = vcombine.high %v2913, %v2929
    %v2972 = vunpack.c.l.s4 1934713408
    %v2973 = vunpack.c.0.s8 %v2972
    %v2974 = vlaneseq
    %v2975 = vshrl.u32 %v2974, 7
    %v2976 = vsub.s32 %v2973, %v2975
    %v2977 = vrot.slane %v2969, %v2976
    %v2979 = vunpack.c.l.s4 1934713408
    %v2980 = vunpack.c.0.s8 %v2979
    %v2981 = vlaneseq
    %v2982 = vshrl.u32 %v2981, 7
    %v2983 = vsub.s32 %v2980, %v2982
    %v2984 = vrot.slane %v2970, %v2983
    %v2985 = vcombine.low %v2920, %v2936
    %v2986 = vcombine.high %v2920, %v2936
    %v2988 = vunpack.c.l.s4 1934713408
    %v2989 = vunpack.c.0.s8 %v2988
    %v2990 = vlaneseq
    %v2991 = vshrl.u32 %v2990, 7
    %v2992 = vsub.s32 %v2989, %v2991
    %v2993 = vrot.slane %v2985, %v2992
    %v2995 = vunpack.c.l.s4 1934713408
    %v2996 = vunpack.c.0.s8 %v2995
    %v2997 = vlaneseq
    %v2998 = vshrl.u32 %v2997, 7
    %v2999 = vsub.s32 %v2996, %v2998
    %v3000 = vrot.slane %v2986, %v2999
    %v3001 = vcombine.low %v2945, %v2977
    %v3002 = vcombine.high %v2945, %v2977
    %v3003 = vcombine.low %v2952, %v2984
    %v3004 = vcombine.high %v2952, %v2984
    %v3005 = vcombine.low %v2961, %v2993
    %v3006 = vcombine.high %v2961, %v2993
    %v3007 = vcombine.low %v2968, %v3000
    %v3008 = vcombine.high %v2968, %v3000
    %3010 = vrot.lane.b32.xlu0 %v3002, 32
    %v3011 = vpop.permute.xlu0 %3010
    %3014 = vrot.lane.b32.xlu0 %v3003, 64
    %v3015 = vpop.permute.xlu0 %3014
    %3018 = vrot.lane.b32.xlu0 %v3004, 96
    %v3019 = vpop.permute.xlu0 %3018
    %3022 = vrot.lane.b32.xlu0 %v3006, 32
    %v3023 = vpop.permute.xlu0 %3022
    %3026 = vrot.lane.b32.xlu0 %v3007, 64
    %v3027 = vpop.permute.xlu0 %3026
    %3030 = vrot.lane.b32.xlu0 %v3008, 96
    %v3031 = vpop.permute.xlu0 %3030
    %v3033 = vsel %vm206, %v3001, %v3011
    %v3034 = vsel %vm445, %v3033, %v3015
    %v3035 = vsel %vm454, %v3034, %v3019
    %v3036 = vsel %vm206, %v3005, %v3023
    %v3037 = vsel %vm445, %v3036, %v3027
    %v3038 = vsel %vm454, %v3037, %v3031
    %v3039 = vld [vmem:[%s3] sm:$0xff]
    %v3040 = vld [vmem:[%s3 + $0x8] sm:$0xff]
    %v3041 = vld [vmem:[%s3 + $0x10] sm:$0xff]
    %v3042 = vld [vmem:[%s3 + $0x18] sm:$0xff]
    %v3043 = vld [vmem:[%s3 + $0x20] sm:$0xff]
    %v3044 = vld [vmem:[%s3 + $0x28] sm:$0xff]
    %v3045 = vld [vmem:[%s3 + $0x30] sm:$0xff]
    %v3046 = vld [vmem:[%s3 + $0x38] sm:$0xff]
    %v3047 = vld [vmem:[%s3 + $0x40] sm:$0xff]
    %v3048 = vld [vmem:[%s3 + $0x48] sm:$0xff]
    %v3049 = vld [vmem:[%s3 + $0x50] sm:$0xff]
    %v3050 = vld [vmem:[%s3 + $0x58] sm:$0xff]
    %v3051 = vld [vmem:[%s3 + $0x60] sm:$0xff]
    %v3052 = vld [vmem:[%s3 + $0x68] sm:$0xff]
    %v3053 = vld [vmem:[%s3 + $0x70] sm:$0xff]
    %v3054 = vld [vmem:[%s3 + $0x78] sm:$0xff]
    %v3055 = vld [vmem:[%s3 + $0x80] sm:$0xff]
    %v3056 = vld [vmem:[%s3 + $0x88] sm:$0xff]
    %v3057 = vld [vmem:[%s3 + $0x90] sm:$0xff]
    %v3058 = vld [vmem:[%s3 + $0x98] sm:$0xff]
    %v3059 = vld [vmem:[%s3 + $0xa0] sm:$0xff]
    %v3060 = vld [vmem:[%s3 + $0xa8] sm:$0xff]
    %v3061 = vld [vmem:[%s3 + $0xb0] sm:$0xff]
    %v3062 = vld [vmem:[%s3 + $0xb8] sm:$0xff]
    %v3063 = vld [vmem:[%s3 + $0xc0] sm:$0xff]
    %v3064 = vld [vmem:[%s3 + $0xc8] sm:$0xff]
    %v3065 = vld [vmem:[%s3 + $0xd0] sm:$0xff]
    %v3066 = vld [vmem:[%s3 + $0xd8] sm:$0xff]
    %v3067 = vld [vmem:[%s3 + $0xe0] sm:$0xff]
    %v3068 = vld [vmem:[%s3 + $0xe8] sm:$0xff]
    %v3069 = vld [vmem:[%s3 + $0xf0] sm:$0xff]
    %v3070 = vld [vmem:[%s3 + $0xf8] sm:$0xff]
    %v3071 = vld [vmem:[%s4] sm:$0x1]
    %v3073 = vlaneseq
    %v3074 = vshrl.u32 %v3073, 7
    %v3075 = vsub.s32 0, %v3074
    %v3076 = vrot.slane %v3071, %v3075
    %3078 = vmatprep.subr.mxu0 0.0
    %3079 = vmatpush1.msra.mxu0 %v3054
    %3080 = vmatprep.subr.mxu0 0.0
    %3081 = vmatpush1.msra.mxu0 %v3053
    %3082 = vmatprep.subr.mxu0 0.0
    %3083 = vmatpush1.msra.mxu0 %v3052
    %3084 = vmatprep.subr.mxu0 0.0
    %3085 = vmatpush1.msra.mxu0 %v3051
    %3086 = vmatprep.subr.mxu0 0.0
    %3087 = vmatpush1.msra.mxu0 %v3050
    %3088 = vmatprep.subr.mxu0 0.0
    %3089 = vmatpush1.msra.mxu0 %v3049
    %3090 = vmatprep.subr.mxu0 0.0
    %3091 = vmatpush1.msra.mxu0 %v3048
    %3092 = vmatprep.subr.mxu0 0.0
    %3093 = vmatpush1.msra.mxu0 %v3047
    %3094 = vmatprep.subr.mxu0 0.0
    %3095 = vmatpush1.msra.mxu0 %v3046
    %3096 = vmatprep.subr.mxu0 0.0
    %3097 = vmatpush1.msra.mxu0 %v3045
    %3098 = vmatprep.subr.mxu0 0.0
    %3099 = vmatpush1.msra.mxu0 %v3044
    %3100 = vmatprep.subr.mxu0 0.0
    %3101 = vmatpush1.msra.mxu0 %v3043
    %3102 = vmatprep.subr.mxu0 0.0
    %3103 = vmatpush1.msra.mxu0 %v3042
    %3104 = vmatprep.subr.mxu0 0.0
    %3105 = vmatpush1.msra.mxu0 %v3041
    %3106 = vmatprep.subr.mxu0 0.0
    %3107 = vmatpush1.msra.mxu0 %v3040
    %3108 = vmatprep.subr.mxu0 0.0
    %3109 = vmatpush1.msra.mxu0 %v3039
    %3110 = vmatprep.subr.mxu0 0.0
    %3111 = vmatpush2.msra.mxu0 %v3070
    %3112 = vmatprep.subr.mxu0 0.0
    %3113 = vmatpush2.msra.mxu0 %v3069
    %3114 = vmatprep.subr.mxu0 0.0
    %3115 = vmatpush2.msra.mxu0 %v3068
    %3116 = vmatprep.subr.mxu0 0.0
    %3117 = vmatpush2.msra.mxu0 %v3067
    %3118 = vmatprep.subr.mxu0 0.0
    %3119 = vmatpush2.msra.mxu0 %v3066
    %3120 = vmatprep.subr.mxu0 0.0
    %3121 = vmatpush2.msra.mxu0 %v3065
    %3122 = vmatprep.subr.mxu0 0.0
    %3123 = vmatpush2.msra.mxu0 %v3064
    %3124 = vmatprep.subr.mxu0 0.0
    %3125 = vmatpush2.msra.mxu0 %v3063
    %3126 = vmatprep.subr.mxu0 0.0
    %3127 = vmatpush2.msra.mxu0 %v3062
    %3128 = vmatprep.subr.mxu0 0.0
    %3129 = vmatpush2.msra.mxu0 %v3061
    %3130 = vmatprep.subr.mxu0 0.0
    %3131 = vmatpush2.msra.mxu0 %v3060
    %3132 = vmatprep.subr.mxu0 0.0
    %3133 = vmatpush2.msra.mxu0 %v3059
    %3134 = vmatprep.subr.mxu0 0.0
    %3135 = vmatpush2.msra.mxu0 %v3058
    %3136 = vmatprep.subr.mxu0 0.0
    %3137 = vmatpush2.msra.mxu0 %v3057
    %3138 = vmatprep.subr.mxu0 0.0
    %3139 = vmatpush2.msra.mxu0 %v3056
    %3140 = vmatprep.subr.mxu0 0.0
    %3141 = vmatpush2.msra.mxu0 %v3055
    %3142 = vmatprep.mubr.f32.mxu0 %v3038
    %3143 = vmatmul.mubr.f32.gmra.mxu0 %v3035
    %v3144 = vpop.f32.mrf.mxu0
    %v3145 = vadd.f32 %v3076, %v3144
    %v3146 = vpop.f32.mrf.mxu0
    %3147 = vdwg.mxu0
    %3148 = vst.msk [vmem:[#allocation2] sm:$0xff] %vm206, %v3145
    // Predicated region
    $region22: #{tpu_custom_call.1} parent=1 // pred_check
      _
    $region23: #{tpu_custom_call.1} parent=1 // pred_check_branch
      %3150 = sbr.rel (0) target = $region25
    $region24: #{tpu_custom_call.1} parent=1 // pred_region
      %s3152 = ssub.s32 128, 128
      %3153 = vsyncadd [#allocation3], %s3152
      %s3155 = sshll.u32 [#allocation2], 4
      %s3156 = int_to_ptr.vmem [resolvable:$true] %s3155
      %3158 = dma.vmem_to_hbm [thread:$0]  %s3156, 128, %s5, [#allocation3]
    $region25: #{tpu_custom_call.1} parent=1 // pred_fallthru
      _
    // Predicated region
    $region26: #{tpu_custom_call.1} parent=1 // pred_check
      _
    $region27: #{tpu_custom_call.1} parent=1 // pred_check_branch
      %3160 = sbr.rel (0) target = $region29
    $region28: #{tpu_custom_call.1} parent=1 // pred_region
      %3161 = dma.done [#allocation3], 128
    $region29: #{tpu_custom_call.1} parent=1 // pred_fallthru
      _
    %3162 = vsyncpa [#allocation3], 1

</llo_original>
